<compile_context>
chip_gen: v5e
topology: v5e:2x2
jax: 0.10.0
libtpu: 0.0.40
codegen_flags: <defaults>
</compile_context>

<pallas_src>
import math

import jax
import jax.numpy as jnp
from jax import lax
from jax.experimental import pallas as pl
from jax.experimental.pallas import tpu as pltpu

# ----------------------- model configuration (small) ------------------------
NUM_ITEMS  = 50
VOCAB      = NUM_ITEMS + 1            # +1 for padding index 0
VPAD       = 128                      # vocab padded to a full 128-lane tile
EMB_DIM    = 32                       # embedding_dim
SEQ_LEN    = 8                        # seq_length
NUM_HEADS  = 4
HEAD_DIM   = EMB_DIM // NUM_HEADS
NUM_LAYERS = 2
FF_DIM     = 2 * EMB_DIM              # feedforward_dim default (2 * embedding_dim)
BATCH      = 2
ROWS       = BATCH * SEQ_LEN          # all sequences flattened into one [ROWS, D] slab
SEL_ROWS   = 8                        # last-position selector padded to a full sublane tile
FUSE_COLS  = 2 * EMB_DIM + NUM_HEADS * EMB_DIM   # [scaled Q | K | per-head Wv@Wo] = 192
LN_EPS     = 1e-5
NEG_INF    = -1e9


# ------------------------------- Pallas kernel ------------------------------
def transformer_kernel(x_ref, mask_ref, sel_ref,
                       wfused_ref, bfused_ref,
                       w1_ref, b1_ref, w2_ref,
                       vec_ref, fin_ref, wout_ref, bout_ref,
                       out_ref):
    x    = x_ref[...]          # [R, D]   flattened batch*seq activations
    mask = mask_ref[...]       # [R, R]   block-diagonal + key-padding additive mask

    def layer_norm(y, gamma, beta):
        mu  = jnp.mean(y, axis=-1, keepdims=True)
        var = jnp.mean((y - mu) * (y - mu), axis=-1, keepdims=True)
        return (y - mu) * lax.rsqrt(var + LN_EPS) * gamma + beta

    for l in range(NUM_LAYERS):                       # static unroll (2 layers)
        # --- multi-head attention --------------------------------------------
        # One fused lane-dense matmul: columns [0,D)   = Q (scale folded in),
        #                              columns [D,2D)  = K,
        #                              columns [2D, 2D+H*D) = per-head V@Wo blocks.
        qkvo = (jnp.dot(x, wfused_ref[l], preferred_element_type=jnp.float32)
                + bfused_ref[l])                                            # [R, 192]

        ctx = None
        for h in range(NUM_HEADS):                     # 4 independent small chains
            q_h  = qkvo[:, h * HEAD_DIM:(h + 1) * HEAD_DIM]                 # [R, 8]
            k_h  = qkvo[:, EMB_DIM + h * HEAD_DIM:EMB_DIM + (h + 1) * HEAD_DIM]
            vo_h = qkvo[:, 2 * EMB_DIM + h * EMB_DIM:2 * EMB_DIM + (h + 1) * EMB_DIM]  # [R, D]
            s = jnp.einsum('qe,ke->qk', q_h, k_h,
                           preferred_element_type=jnp.float32) + mask       # [R, R]
            s = s - jnp.max(s, axis=-1, keepdims=True)
            p = jnp.exp(s)
            p = p * pl.reciprocal(jnp.sum(p, axis=-1, keepdims=True), approx=True)
            h_ctx = jnp.dot(p, vo_h, preferred_element_type=jnp.float32)    # [R, D]
            ctx = h_ctx if ctx is None else ctx + h_ctx
        attn = ctx + vec_ref[6 * l + 0:6 * l + 1]                           # out-proj bias

        # --- post-norm encoder layer (PyTorch norm_first=False, eval) --------
        x  = layer_norm(x + attn, vec_ref[6 * l + 1:6 * l + 2], vec_ref[6 * l + 2:6 * l + 3])
        ff = jnp.maximum(
            jnp.dot(x, w1_ref[l], preferred_element_type=jnp.float32) + b1_ref[l], 0.0)
        ff = jnp.dot(ff, w2_ref[l], preferred_element_type=jnp.float32) + vec_ref[6 * l + 3:6 * l + 4]
        x  = layer_norm(x + ff, vec_ref[6 * l + 4:6 * l + 5], vec_ref[6 * l + 5:6 * l + 6])

    # Select the last valid position of each sequence first (one-hot matmul),
    # then run the final LayerNorm on 8 rows instead of 16 (exact for one-hot
    # selector rows; padded all-zero rows give beta and are sliced off outside).
    last = jnp.dot(sel_ref[...], x, preferred_element_type=jnp.float32)     # [SEL_ROWS, D]
    last = layer_norm(last, fin_ref[0:1], fin_ref[1:2])
    out_ref[...] = (jnp.dot(last, wout_ref[...], preferred_element_type=jnp.float32)
                    + bout_ref[...])                                         # [SEL_ROWS, VPAD]


# ---------------------------- parameter creation ----------------------------
def xavier_uniform(key, fan_in, fan_out):
    limit = math.sqrt(6.0 / (fan_in + fan_out))
    return jax.random.uniform(key, (fan_in, fan_out), jnp.float32, -limit, limit)


def init_params(key):
    """Logical (PyTorch-layout) parameters; folding/packing happens in forward()."""
    D, F, L, V = EMB_DIM, FF_DIM, NUM_LAYERS, VOCAB
    k = jax.random.split(key, 10)

    emb = xavier_uniform(k[0], V, D).at[0].set(0.0)      # padding_idx=0 -> zero row

    def per_layer(kk, fi, fo):
        return jnp.stack([xavier_uniform(s, fi, fo) for s in jax.random.split(kk, L)])

    wq = per_layer(k[1], D, D)
    wk = per_layer(k[2], D, D)
    wv = per_layer(k[3], D, D)
    wo = per_layer(k[4], D, D)
    w1 = per_layer(k[5], D, F)
    w2 = per_layer(k[6], F, D)

    def small(kk, shape):                                 # nonzero biases/LN params so the
        return 0.02 * jax.random.normal(kk, shape, jnp.float32)   # folding paths are exercised

    kb = jax.random.split(k[7], 8)
    bq, bk, bv, bo = (small(kb[i], (L, D)) for i in range(4))
    b1 = small(kb[4], (L, F))
    b2 = small(kb[5], (L, D))
    kl = jax.random.split(k[8], 6)
    g1  = 1.0 + small(kl[0], (L, D)); be1 = small(kl[1], (L, D))
    g2  = 1.0 + small(kl[2], (L, D)); be2 = small(kl[3], (L, D))
    fin_g = 1.0 + small(kl[4], (D,)); fin_b = small(kl[5], (D,))

    wout = xavier_uniform(k[9], D, V)
    bout = jnp.zeros((V,), jnp.float32)

    return dict(emb=emb, wq=wq, wk=wk, wv=wv, wo=wo, bq=bq, bk=bk, bv=bv, bo=bo,
                w1=w1, b1=b1, w2=w2, b2=b2, g1=g1, be1=be1, g2=g2, be2=be2,
                fin_g=fin_g, fin_b=fin_b, wout=wout, bout=bout)


# ------------------------------- wrapper -------------------------------------
def forward(item_sequence, params):
    B, S = item_sequence.shape
    R = B * S
    L, D, H, HD = NUM_LAYERS, EMB_DIM, NUM_HEADS, HEAD_DIM

    # glue: embedding gather + mask / last-position setup (host-side JAX, fused by XLA)
    emb = params["emb"][item_sequence].astype(jnp.float32).reshape(R, D)
    pad_flat = (item_sequence == 0).reshape(R)
    batch_id = jnp.repeat(jnp.arange(B), S)
    same_batch = batch_id[:, None] == batch_id[None, :]
    # additive mask: 0 for same-batch valid keys, -1e9 for padded or cross-batch keys.
    # TODO(synk): a fully padded sequence attends uniformly over all ROWS keys here
    # (PyTorch would produce NaN for fully masked rows) — acceptable for valid inputs.
    mask2d = jnp.where(same_batch & ~pad_flat[None, :], 0.0, NEG_INF).astype(jnp.float32)

    vlen = jnp.maximum(jnp.sum(item_sequence != 0, axis=1) - 1, 0)       # last valid index
    sel_pos = jnp.arange(B) * S + vlen                                    # flattened row index
    sel = jnp.zeros((SEL_ROWS, R), jnp.float32).at[jnp.arange(B), sel_pos].set(1.0)

    # --- fold/pack parameters into lane-dense kernel operands (tiny, once per call) ---
    scale = 1.0 / math.sqrt(HD)
    wv_h = params["wv"].reshape(L, D, H, HD)                              # [L, D, H, HD]
    wo_h = params["wo"].reshape(L, H, HD, D)                              # [L, H, HD, D]
    wvo  = jnp.einsum('ldhe,lhef->lhdf', wv_h, wo_h)                      # [L, H, D, D]
    wvo  = wvo.transpose(0, 2, 1, 3).reshape(L, D, H * D)                 # [L, D, H*D]
    bvo  = jnp.einsum('lhe,lhef->lhf',
                      params["bv"].reshape(L, H, HD), wo_h).reshape(L, H * D)
    wfused = jnp.concatenate([params["wq"] * scale, params["wk"], wvo], axis=-1)   # [L, D, 192]
    bfused = jnp.concatenate([params["bq"] * scale, params["bk"], bvo],
                             axis=-1)[:, None, :]                                   # [L, 1, 192]

    # packed per-layer [D] vectors: 0=out-proj bias, 1=gamma1, 2=beta1, 3=ffn bias2, 4=gamma2, 5=beta2
    vec = jnp.stack([params["bo"], params["g1"], params["be1"],
                     params["b2"], params["g2"], params["be2"]], axis=1).reshape(L * 6, D)
    fin = jnp.stack([params["fin_g"], params["fin_b"]])                   # [2, D]
    b1  = params["b1"][:, None, :]                                        # [L, 1, F]
    wout = jnp.zeros((D, VPAD), jnp.float32).at[:, :VOCAB].set(params["wout"])   # vocab -> 128 lanes
    bout = jnp.zeros((1, VPAD), jnp.float32).at[0, :VOCAB].set(params["bout"])

    inputs = (emb, mask2d, sel,
              wfused, bfused,
              params["w1"], b1, params["w2"],
              vec, fin, wout, bout)

    mm = lambda m, k, n: 2 * m * k * n
    flops_layer = (mm(R, D, FUSE_COLS)
                   + NUM_HEADS * (mm(R, HD, R) + mm(R, R, D))
                   + mm(R, D, FF_DIM) + mm(R, FF_DIM, D))
    cost = pl.CostEstimate(
        flops=NUM_LAYERS * flops_layer + mm(SEL_ROWS, R, D) + mm(SEL_ROWS, D, VPAD),
        transcendentals=NUM_LAYERS * NUM_HEADS * R * (R + 1) + (2 * NUM_LAYERS) * R + SEL_ROWS,
        bytes_accessed=4 * (sum(int(a.size) for a in inputs) + SEL_ROWS * VPAD),
    )

    vmem_spec = pl.BlockSpec(memory_space=pltpu.MemorySpace.VMEM)
    out = pl.pallas_call(
        transformer_kernel,
        out_shape=jax.ShapeDtypeStruct((SEL_ROWS, VPAD), jnp.float32),
        in_specs=[vmem_spec] * len(inputs),
        out_specs=vmem_spec,
        cost_estimate=cost,
    )(*inputs)
    return out[:B, :VOCAB]                                      # [B, V] logits


# --------------------------- pure-JAX reference ------------------------------
def forward_ref(item_sequence, p):
    """PyTorch-faithful math on the logical (un-folded, un-packed) parameters."""
    B, S = item_sequence.shape
    H, HD, D = NUM_HEADS, HEAD_DIM, EMB_DIM
    pad  = item_sequence == 0
    bias = jnp.where(pad, NEG_INF, 0.0).astype(jnp.float32)[:, None, None, :]   # [B,1,1,S]
    x = p["emb"][item_sequence].astype(jnp.float32)                             # [B,S,D]

    def ln(y, g, b):
        mu  = y.mean(-1, keepdims=True)
        var = ((y - mu) ** 2).mean(-1, keepdims=True)
        return (y - mu) / jnp.sqrt(var + LN_EPS) * g + b

    scale = 1.0 / math.sqrt(HD)
    for l in range(NUM_LAYERS):
        q = (x @ p["wq"][l] + p["bq"][l]).reshape(B, S, H, HD).transpose(0, 2, 1, 3)
        k = (x @ p["wk"][l] + p["bk"][l]).reshape(B, S, H, HD).transpose(0, 2, 1, 3)
        v = (x @ p["wv"][l] + p["bv"][l]).reshape(B, S, H, HD).transpose(0, 2, 1, 3)
        s = jnp.einsum("bhqe,bhke->bhqk", q, k) * scale + bias
        w = jax.nn.softmax(s, axis=-1)
        ctx = jnp.einsum("bhqk,bhke->bhqe", w, v).transpose(0, 2, 1, 3).reshape(B, S, D)
        attn = ctx @ p["wo"][l] + p["bo"][l]
        x = ln(x + attn, p["g1"][l], p["be1"][l])
        ff = jax.nn.relu(x @ p["w1"][l] + p["b1"][l]) @ p["w2"][l] + p["b2"][l]
        x = ln(x + ff, p["g2"][l], p["be2"][l])
    x = ln(x, p["fin_g"], p["fin_b"])
    vlen = jnp.maximum(jnp.sum(~pad, axis=1) - 1, 0)
    last = x[jnp.arange(B), vlen]
    return last @ p["wout"] + p["bout"]


# ---------------------------------- main -------------------------------------
if __name__ == "__main__":
    key = jax.random.PRNGKey(0)
    kparam, kseq = jax.random.split(key)
    params = init_params(kparam)

    item_sequence = jax.random.randint(kseq, (BATCH, SEQ_LEN), 1, VOCAB, dtype=jnp.int32)
    item_sequence = item_sequence.at[1, 5:].set(0)           # trailing padding on row 1

    logits = jax.jit(forward)(item_sequence, params)
    logits = jax.block_until_ready(logits)

    ref = forward_ref(item_sequence, params)
    assert logits.shape == (BATCH, VOCAB), logits.shape
    assert bool(jnp.all(jnp.isfinite(logits)))
    max_err = float(jnp.max(jnp.abs(logits - ref)))
    assert max_err < 5e-2, f"mismatch vs reference: {max_err}"
    print("KERNEL_OK")
</pallas_src>

<mosaic_0001>
module attributes {stable_mosaic.version = 11 : i64} {
  func.func @transformer_kernel(%arg0: memref<16x32xf32, #tpu.memory_space<vmem>>, %arg1: memref<16x16xf32, #tpu.memory_space<vmem>>, %arg2: memref<8x16xf32, #tpu.memory_space<vmem>>, %arg3: memref<2x32x192xf32, #tpu.memory_space<vmem>>, %arg4: memref<2x1x192xf32, #tpu.memory_space<vmem>>, %arg5: memref<2x32x64xf32, #tpu.memory_space<vmem>>, %arg6: memref<2x1x64xf32, #tpu.memory_space<vmem>>, %arg7: memref<2x64x32xf32, #tpu.memory_space<vmem>>, %arg8: memref<12x32xf32, #tpu.memory_space<vmem>>, %arg9: memref<2x32xf32, #tpu.memory_space<vmem>>, %arg10: memref<32x128xf32, #tpu.memory_space<vmem>>, %arg11: memref<1x128xf32, #tpu.memory_space<vmem>>, %arg12: memref<8x128xf32, #tpu.memory_space<vmem>>) attributes {dimension_semantics = [], scalar_prefetch = 0 : i64, scratch_operands = 0 : i64, tpu.core_type = #tpu.core_type<tc>} {
    %c0 = arith.constant 0 : index
    %c0_0 = arith.constant 0 : index
    %0 = vector.load %arg0[%c0, %c0_0] : memref<16x32xf32, #tpu.memory_space<vmem>>, vector<16x32xf32>
    %c0_1 = arith.constant 0 : index
    %c0_2 = arith.constant 0 : index
    %1 = vector.load %arg1[%c0_1, %c0_2] : memref<16x16xf32, #tpu.memory_space<vmem>>, vector<16x16xf32>
    %c0_3 = arith.constant 0 : index
    %c0_4 = arith.constant 0 : index
    %c0_5 = arith.constant 0 : index
    %2 = vector.load %arg3[%c0_3, %c0_4, %c0_5] : memref<2x32x192xf32, #tpu.memory_space<vmem>>, vector<1x32x192xf32>
    %3 = vector.shape_cast %2 : vector<1x32x192xf32> to vector<32x192xf32>
    %cst = arith.constant dense<0.000000e+00> : vector<16x192xf32>
    %4 = tpu.matmul %0, %3, %cst {dimension_numbers = #tpu.dot_dimension_numbers<[1], [0], [0], [1], [0, 0, 1, 1], [], []>} : vector<16x32xf32>, vector<32x192xf32>, vector<16x192xf32> -> vector<16x192xf32>
    %c0_6 = arith.constant 0 : index
    %c0_7 = arith.constant 0 : index
    %c0_8 = arith.constant 0 : index
    %5 = vector.load %arg4[%c0_6, %c0_7, %c0_8] : memref<2x1x192xf32, #tpu.memory_space<vmem>>, vector<1x1x192xf32>
    %6 = vector.shape_cast %5 : vector<1x1x192xf32> to vector<1x192xf32>
    %7 = vector.broadcast %6 : vector<1x192xf32> to vector<16x192xf32>
    %8 = arith.addf %4, %7 : vector<16x192xf32>
    %9 = vector.extract_strided_slice %8 {offsets = [0, 0], sizes = [16, 8], strides = [1, 1]} : vector<16x192xf32> to vector<16x8xf32>
    %10 = vector.extract_strided_slice %8 {offsets = [0, 32], sizes = [16, 8], strides = [1, 1]} : vector<16x192xf32> to vector<16x8xf32>
    %11 = vector.extract_strided_slice %8 {offsets = [0, 64], sizes = [16, 32], strides = [1, 1]} : vector<16x192xf32> to vector<16x32xf32>
    "tpu.trace_start"() <{level = 10 : i32, message = "qe,ke->qk"}> : () -> ()
    %cst_9 = arith.constant dense<0.000000e+00> : vector<16x16xf32>
    %12 = tpu.matmul %9, %10, %cst_9 {dimension_numbers = #tpu.dot_dimension_numbers<[1], [1], [0], [0], [0, 0, 1, 0], [], []>} : vector<16x8xf32>, vector<16x8xf32>, vector<16x16xf32> -> vector<16x16xf32>
    "tpu.trace_stop"() : () -> ()
    %13 = arith.addf %12, %1 : vector<16x16xf32>
    %cst_10 = arith.constant dense<0xFF800000> : vector<16xf32>
    %14 = vector.multi_reduction <maximumf>, %13, %cst_10 [1] : vector<16x16xf32> to vector<16xf32>
    %15 = vector.shape_cast %14 : vector<16xf32> to vector<16x1xf32>
    %16 = vector.broadcast %15 : vector<16x1xf32> to vector<16x16xf32>
    %17 = arith.subf %13, %16 : vector<16x16xf32>
    %18 = math.exp %17 : vector<16x16xf32>
    %cst_11 = arith.constant dense<0.000000e+00> : vector<16xf32>
    %19 = vector.multi_reduction <add>, %18, %cst_11 [1] : vector<16x16xf32> to vector<16xf32>
    %20 = vector.shape_cast %19 : vector<16xf32> to vector<16x1xf32>
    %21 = tpu.reciprocal %20 {approx = true} : vector<16x1xf32> -> vector<16x1xf32>
    %22 = vector.broadcast %21 : vector<16x1xf32> to vector<16x16xf32>
    %23 = arith.mulf %18, %22 : vector<16x16xf32>
    %cst_12 = arith.constant dense<0.000000e+00> : vector<16x32xf32>
    %24 = tpu.matmul %23, %11, %cst_12 {dimension_numbers = #tpu.dot_dimension_numbers<[1], [0], [0], [1], [0, 0, 1, 1], [], []>} : vector<16x16xf32>, vector<16x32xf32>, vector<16x32xf32> -> vector<16x32xf32>
    %25 = vector.extract_strided_slice %8 {offsets = [0, 8], sizes = [16, 8], strides = [1, 1]} : vector<16x192xf32> to vector<16x8xf32>
    %26 = vector.extract_strided_slice %8 {offsets = [0, 40], sizes = [16, 8], strides = [1, 1]} : vector<16x192xf32> to vector<16x8xf32>
    %27 = vector.extract_strided_slice %8 {offsets = [0, 96], sizes = [16, 32], strides = [1, 1]} : vector<16x192xf32> to vector<16x32xf32>
    "tpu.trace_start"() <{level = 10 : i32, message = "qe,ke->qk"}> : () -> ()
    %cst_13 = arith.constant dense<0.000000e+00> : vector<16x16xf32>
    %28 = tpu.matmul %25, %26, %cst_13 {dimension_numbers = #tpu.dot_dimension_numbers<[1], [1], [0], [0], [0, 0, 1, 0], [], []>} : vector<16x8xf32>, vector<16x8xf32>, vector<16x16xf32> -> vector<16x16xf32>
    "tpu.trace_stop"() : () -> ()
    %29 = arith.addf %28, %1 : vector<16x16xf32>
    %cst_14 = arith.constant dense<0xFF800000> : vector<16xf32>
    %30 = vector.multi_reduction <maximumf>, %29, %cst_14 [1] : vector<16x16xf32> to vector<16xf32>
    %31 = vector.shape_cast %30 : vector<16xf32> to vector<16x1xf32>
    %32 = vector.broadcast %31 : vector<16x1xf32> to vector<16x16xf32>
    %33 = arith.subf %29, %32 : vector<16x16xf32>
    %34 = math.exp %33 : vector<16x16xf32>
    %cst_15 = arith.constant dense<0.000000e+00> : vector<16xf32>
    %35 = vector.multi_reduction <add>, %34, %cst_15 [1] : vector<16x16xf32> to vector<16xf32>
    %36 = vector.shape_cast %35 : vector<16xf32> to vector<16x1xf32>
    %37 = tpu.reciprocal %36 {approx = true} : vector<16x1xf32> -> vector<16x1xf32>
    %38 = vector.broadcast %37 : vector<16x1xf32> to vector<16x16xf32>
    %39 = arith.mulf %34, %38 : vector<16x16xf32>
    %cst_16 = arith.constant dense<0.000000e+00> : vector<16x32xf32>
    %40 = tpu.matmul %39, %27, %cst_16 {dimension_numbers = #tpu.dot_dimension_numbers<[1], [0], [0], [1], [0, 0, 1, 1], [], []>} : vector<16x16xf32>, vector<16x32xf32>, vector<16x32xf32> -> vector<16x32xf32>
    %41 = arith.addf %24, %40 : vector<16x32xf32>
    %42 = vector.extract_strided_slice %8 {offsets = [0, 16], sizes = [16, 8], strides = [1, 1]} : vector<16x192xf32> to vector<16x8xf32>
    %43 = vector.extract_strided_slice %8 {offsets = [0, 48], sizes = [16, 8], strides = [1, 1]} : vector<16x192xf32> to vector<16x8xf32>
    %44 = vector.extract_strided_slice %8 {offsets = [0, 128], sizes = [16, 32], strides = [1, 1]} : vector<16x192xf32> to vector<16x32xf32>
    "tpu.trace_start"() <{level = 10 : i32, message = "qe,ke->qk"}> : () -> ()
    %cst_17 = arith.constant dense<0.000000e+00> : vector<16x16xf32>
    %45 = tpu.matmul %42, %43, %cst_17 {dimension_numbers = #tpu.dot_dimension_numbers<[1], [1], [0], [0], [0, 0, 1, 0], [], []>} : vector<16x8xf32>, vector<16x8xf32>, vector<16x16xf32> -> vector<16x16xf32>
    "tpu.trace_stop"() : () -> ()
    %46 = arith.addf %45, %1 : vector<16x16xf32>
    %cst_18 = arith.constant dense<0xFF800000> : vector<16xf32>
    %47 = vector.multi_reduction <maximumf>, %46, %cst_18 [1] : vector<16x16xf32> to vector<16xf32>
    %48 = vector.shape_cast %47 : vector<16xf32> to vector<16x1xf32>
    %49 = vector.broadcast %48 : vector<16x1xf32> to vector<16x16xf32>
    %50 = arith.subf %46, %49 : vector<16x16xf32>
    %51 = math.exp %50 : vector<16x16xf32>
    %cst_19 = arith.constant dense<0.000000e+00> : vector<16xf32>
    %52 = vector.multi_reduction <add>, %51, %cst_19 [1] : vector<16x16xf32> to vector<16xf32>
    %53 = vector.shape_cast %52 : vector<16xf32> to vector<16x1xf32>
    %54 = tpu.reciprocal %53 {approx = true} : vector<16x1xf32> -> vector<16x1xf32>
    %55 = vector.broadcast %54 : vector<16x1xf32> to vector<16x16xf32>
    %56 = arith.mulf %51, %55 : vector<16x16xf32>
    %cst_20 = arith.constant dense<0.000000e+00> : vector<16x32xf32>
    %57 = tpu.matmul %56, %44, %cst_20 {dimension_numbers = #tpu.dot_dimension_numbers<[1], [0], [0], [1], [0, 0, 1, 1], [], []>} : vector<16x16xf32>, vector<16x32xf32>, vector<16x32xf32> -> vector<16x32xf32>
    %58 = arith.addf %41, %57 : vector<16x32xf32>
    %59 = vector.extract_strided_slice %8 {offsets = [0, 24], sizes = [16, 8], strides = [1, 1]} : vector<16x192xf32> to vector<16x8xf32>
    %60 = vector.extract_strided_slice %8 {offsets = [0, 56], sizes = [16, 8], strides = [1, 1]} : vector<16x192xf32> to vector<16x8xf32>
    %61 = vector.extract_strided_slice %8 {offsets = [0, 160], sizes = [16, 32], strides = [1, 1]} : vector<16x192xf32> to vector<16x32xf32>
    "tpu.trace_start"() <{level = 10 : i32, message = "qe,ke->qk"}> : () -> ()
    %cst_21 = arith.constant dense<0.000000e+00> : vector<16x16xf32>
    %62 = tpu.matmul %59, %60, %cst_21 {dimension_numbers = #tpu.dot_dimension_numbers<[1], [1], [0], [0], [0, 0, 1, 0], [], []>} : vector<16x8xf32>, vector<16x8xf32>, vector<16x16xf32> -> vector<16x16xf32>
    "tpu.trace_stop"() : () -> ()
    %63 = arith.addf %62, %1 : vector<16x16xf32>
    %cst_22 = arith.constant dense<0xFF800000> : vector<16xf32>
    %64 = vector.multi_reduction <maximumf>, %63, %cst_22 [1] : vector<16x16xf32> to vector<16xf32>
    %65 = vector.shape_cast %64 : vector<16xf32> to vector<16x1xf32>
    %66 = vector.broadcast %65 : vector<16x1xf32> to vector<16x16xf32>
    %67 = arith.subf %63, %66 : vector<16x16xf32>
    %68 = math.exp %67 : vector<16x16xf32>
    %cst_23 = arith.constant dense<0.000000e+00> : vector<16xf32>
    %69 = vector.multi_reduction <add>, %68, %cst_23 [1] : vector<16x16xf32> to vector<16xf32>
    %70 = vector.shape_cast %69 : vector<16xf32> to vector<16x1xf32>
    %71 = tpu.reciprocal %70 {approx = true} : vector<16x1xf32> -> vector<16x1xf32>
    %72 = vector.broadcast %71 : vector<16x1xf32> to vector<16x16xf32>
    %73 = arith.mulf %68, %72 : vector<16x16xf32>
    %cst_24 = arith.constant dense<0.000000e+00> : vector<16x32xf32>
    %74 = tpu.matmul %73, %61, %cst_24 {dimension_numbers = #tpu.dot_dimension_numbers<[1], [0], [0], [1], [0, 0, 1, 1], [], []>} : vector<16x16xf32>, vector<16x32xf32>, vector<16x32xf32> -> vector<16x32xf32>
    %75 = arith.addf %58, %74 : vector<16x32xf32>
    %c0_25 = arith.constant 0 : index
    %c0_26 = arith.constant 0 : index
    %76 = vector.load %arg8[%c0_25, %c0_26] : memref<12x32xf32, #tpu.memory_space<vmem>>, vector<1x32xf32>
    %77 = vector.broadcast %76 : vector<1x32xf32> to vector<16x32xf32>
    %78 = arith.addf %75, %77 : vector<16x32xf32>
    %79 = arith.addf %0, %78 : vector<16x32xf32>
    %c1 = arith.constant 1 : index
    %c0_27 = arith.constant 0 : index
    %80 = vector.load %arg8[%c1, %c0_27] : memref<12x32xf32, #tpu.memory_space<vmem>>, vector<1x32xf32>
    %c2 = arith.constant 2 : index
    %c0_28 = arith.constant 0 : index
    %81 = vector.load %arg8[%c2, %c0_28] : memref<12x32xf32, #tpu.memory_space<vmem>>, vector<1x32xf32>
    %cst_29 = arith.constant dense<0.000000e+00> : vector<16xf32>
    %82 = vector.multi_reduction <add>, %79, %cst_29 [1] : vector<16x32xf32> to vector<16xf32>
    %83 = vector.shape_cast %82 : vector<16xf32> to vector<16x1xf32>
    %cst_30 = arith.constant 3.200000e+01 : f32
    %84 = vector.broadcast %cst_30 : f32 to vector<16x1xf32>
    %85 = arith.divf %83, %84 : vector<16x1xf32>
    %86 = vector.broadcast %85 : vector<16x1xf32> to vector<16x32xf32>
    %87 = arith.subf %79, %86 : vector<16x32xf32>
    %88 = vector.broadcast %85 : vector<16x1xf32> to vector<16x32xf32>
    %89 = arith.subf %79, %88 : vector<16x32xf32>
    %90 = arith.mulf %87, %89 : vector<16x32xf32>
    %cst_31 = arith.constant dense<0.000000e+00> : vector<16xf32>
    %91 = vector.multi_reduction <add>, %90, %cst_31 [1] : vector<16x32xf32> to vector<16xf32>
    %92 = vector.shape_cast %91 : vector<16xf32> to vector<16x1xf32>
    %cst_32 = arith.constant 3.200000e+01 : f32
    %93 = vector.broadcast %cst_32 : f32 to vector<16x1xf32>
    %94 = arith.divf %92, %93 : vector<16x1xf32>
    %95 = vector.broadcast %85 : vector<16x1xf32> to vector<16x32xf32>
    %96 = arith.subf %79, %95 : vector<16x32xf32>
    %cst_33 = arith.constant 9.99999974E-6 : f32
    %97 = vector.broadcast %cst_33 : f32 to vector<16x1xf32>
    %98 = arith.addf %94, %97 : vector<16x1xf32>
    %99 = math.rsqrt %98 : vector<16x1xf32>
    %100 = vector.broadcast %99 : vector<16x1xf32> to vector<16x32xf32>
    %101 = arith.mulf %96, %100 : vector<16x32xf32>
    %102 = vector.broadcast %80 : vector<1x32xf32> to vector<16x32xf32>
    %103 = arith.mulf %101, %102 : vector<16x32xf32>
    %104 = vector.broadcast %81 : vector<1x32xf32> to vector<16x32xf32>
    %105 = arith.addf %103, %104 : vector<16x32xf32>
    %c0_34 = arith.constant 0 : index
    %c0_35 = arith.constant 0 : index
    %c0_36 = arith.constant 0 : index
    %106 = vector.load %arg5[%c0_34, %c0_35, %c0_36] : memref<2x32x64xf32, #tpu.memory_space<vmem>>, vector<1x32x64xf32>
    %107 = vector.shape_cast %106 : vector<1x32x64xf32> to vector<32x64xf32>
    %cst_37 = arith.constant dense<0.000000e+00> : vector<16x64xf32>
    %108 = tpu.matmul %105, %107, %cst_37 {dimension_numbers = #tpu.dot_dimension_numbers<[1], [0], [0], [1], [0, 0, 1, 1], [], []>} : vector<16x32xf32>, vector<32x64xf32>, vector<16x64xf32> -> vector<16x64xf32>
    %c0_38 = arith.constant 0 : index
    %c0_39 = arith.constant 0 : index
    %c0_40 = arith.constant 0 : index
    %109 = vector.load %arg6[%c0_38, %c0_39, %c0_40] : memref<2x1x64xf32, #tpu.memory_space<vmem>>, vector<1x1x64xf32>
    %110 = vector.shape_cast %109 : vector<1x1x64xf32> to vector<1x64xf32>
    %111 = vector.broadcast %110 : vector<1x64xf32> to vector<16x64xf32>
    %112 = arith.addf %108, %111 : vector<16x64xf32>
    %cst_41 = arith.constant 0.000000e+00 : f32
    %113 = vector.broadcast %cst_41 : f32 to vector<16x64xf32>
    %114 = arith.maximumf %112, %113 : vector<16x64xf32>
    %c0_42 = arith.constant 0 : index
    %c0_43 = arith.constant 0 : index
    %c0_44 = arith.constant 0 : index
    %115 = vector.load %arg7[%c0_42, %c0_43, %c0_44] : memref<2x64x32xf32, #tpu.memory_space<vmem>>, vector<1x64x32xf32>
    %116 = vector.shape_cast %115 : vector<1x64x32xf32> to vector<64x32xf32>
    %cst_45 = arith.constant dense<0.000000e+00> : vector<16x32xf32>
    %117 = tpu.matmul %114, %116, %cst_45 {dimension_numbers = #tpu.dot_dimension_numbers<[1], [0], [0], [1], [0, 0, 1, 1], [], []>} : vector<16x64xf32>, vector<64x32xf32>, vector<16x32xf32> -> vector<16x32xf32>
    %c3 = arith.constant 3 : index
    %c0_46 = arith.constant 0 : index
    %118 = vector.load %arg8[%c3, %c0_46] : memref<12x32xf32, #tpu.memory_space<vmem>>, vector<1x32xf32>
    %119 = vector.broadcast %118 : vector<1x32xf32> to vector<16x32xf32>
    %120 = arith.addf %117, %119 : vector<16x32xf32>
    %121 = arith.addf %105, %120 : vector<16x32xf32>
    %c4 = arith.constant 4 : index
    %c0_47 = arith.constant 0 : index
    %122 = vector.load %arg8[%c4, %c0_47] : memref<12x32xf32, #tpu.memory_space<vmem>>, vector<1x32xf32>
    %c5 = arith.constant 5 : index
    %c0_48 = arith.constant 0 : index
    %123 = vector.load %arg8[%c5, %c0_48] : memref<12x32xf32, #tpu.memory_space<vmem>>, vector<1x32xf32>
    %cst_49 = arith.constant dense<0.000000e+00> : vector<16xf32>
    %124 = vector.multi_reduction <add>, %121, %cst_49 [1] : vector<16x32xf32> to vector<16xf32>
    %125 = vector.shape_cast %124 : vector<16xf32> to vector<16x1xf32>
    %cst_50 = arith.constant 3.200000e+01 : f32
    %126 = vector.broadcast %cst_50 : f32 to vector<16x1xf32>
    %127 = arith.divf %125, %126 : vector<16x1xf32>
    %128 = vector.broadcast %127 : vector<16x1xf32> to vector<16x32xf32>
    %129 = arith.subf %121, %128 : vector<16x32xf32>
    %130 = vector.broadcast %127 : vector<16x1xf32> to vector<16x32xf32>
    %131 = arith.subf %121, %130 : vector<16x32xf32>
    %132 = arith.mulf %129, %131 : vector<16x32xf32>
    %cst_51 = arith.constant dense<0.000000e+00> : vector<16xf32>
    %133 = vector.multi_reduction <add>, %132, %cst_51 [1] : vector<16x32xf32> to vector<16xf32>
    %134 = vector.shape_cast %133 : vector<16xf32> to vector<16x1xf32>
    %cst_52 = arith.constant 3.200000e+01 : f32
    %135 = vector.broadcast %cst_52 : f32 to vector<16x1xf32>
    %136 = arith.divf %134, %135 : vector<16x1xf32>
    %137 = vector.broadcast %127 : vector<16x1xf32> to vector<16x32xf32>
    %138 = arith.subf %121, %137 : vector<16x32xf32>
    %cst_53 = arith.constant 9.99999974E-6 : f32
    %139 = vector.broadcast %cst_53 : f32 to vector<16x1xf32>
    %140 = arith.addf %136, %139 : vector<16x1xf32>
    %141 = math.rsqrt %140 : vector<16x1xf32>
    %142 = vector.broadcast %141 : vector<16x1xf32> to vector<16x32xf32>
    %143 = arith.mulf %138, %142 : vector<16x32xf32>
    %144 = vector.broadcast %122 : vector<1x32xf32> to vector<16x32xf32>
    %145 = arith.mulf %143, %144 : vector<16x32xf32>
    %146 = vector.broadcast %123 : vector<1x32xf32> to vector<16x32xf32>
    %147 = arith.addf %145, %146 : vector<16x32xf32>
    %c1_54 = arith.constant 1 : index
    %c0_55 = arith.constant 0 : index
    %c0_56 = arith.constant 0 : index
    %148 = vector.load %arg3[%c1_54, %c0_55, %c0_56] : memref<2x32x192xf32, #tpu.memory_space<vmem>>, vector<1x32x192xf32>
    %149 = vector.shape_cast %148 : vector<1x32x192xf32> to vector<32x192xf32>
    %cst_57 = arith.constant dense<0.000000e+00> : vector<16x192xf32>
    %150 = tpu.matmul %147, %149, %cst_57 {dimension_numbers = #tpu.dot_dimension_numbers<[1], [0], [0], [1], [0, 0, 1, 1], [], []>} : vector<16x32xf32>, vector<32x192xf32>, vector<16x192xf32> -> vector<16x192xf32>
    %c1_58 = arith.constant 1 : index
    %c0_59 = arith.constant 0 : index
    %c0_60 = arith.constant 0 : index
    %151 = vector.load %arg4[%c1_58, %c0_59, %c0_60] : memref<2x1x192xf32, #tpu.memory_space<vmem>>, vector<1x1x192xf32>
    %152 = vector.shape_cast %151 : vector<1x1x192xf32> to vector<1x192xf32>
    %153 = vector.broadcast %152 : vector<1x192xf32> to vector<16x192xf32>
    %154 = arith.addf %150, %153 : vector<16x192xf32>
    %155 = vector.extract_strided_slice %154 {offsets = [0, 0], sizes = [16, 8], strides = [1, 1]} : vector<16x192xf32> to vector<16x8xf32>
    %156 = vector.extract_strided_slice %154 {offsets = [0, 32], sizes = [16, 8], strides = [1, 1]} : vector<16x192xf32> to vector<16x8xf32>
    %157 = vector.extract_strided_slice %154 {offsets = [0, 64], sizes = [16, 32], strides = [1, 1]} : vector<16x192xf32> to vector<16x32xf32>
    "tpu.trace_start"() <{level = 10 : i32, message = "qe,ke->qk"}> : () -> ()
    %cst_61 = arith.constant dense<0.000000e+00> : vector<16x16xf32>
    %158 = tpu.matmul %155, %156, %cst_61 {dimension_numbers = #tpu.dot_dimension_numbers<[1], [1], [0], [0], [0, 0, 1, 0], [], []>} : vector<16x8xf32>, vector<16x8xf32>, vector<16x16xf32> -> vector<16x16xf32>
    "tpu.trace_stop"() : () -> ()
    %159 = arith.addf %158, %1 : vector<16x16xf32>
    %cst_62 = arith.constant dense<0xFF800000> : vector<16xf32>
    %160 = vector.multi_reduction <maximumf>, %159, %cst_62 [1] : vector<16x16xf32> to vector<16xf32>
    %161 = vector.shape_cast %160 : vector<16xf32> to vector<16x1xf32>
    %162 = vector.broadcast %161 : vector<16x1xf32> to vector<16x16xf32>
    %163 = arith.subf %159, %162 : vector<16x16xf32>
    %164 = math.exp %163 : vector<16x16xf32>
    %cst_63 = arith.constant dense<0.000000e+00> : vector<16xf32>
    %165 = vector.multi_reduction <add>, %164, %cst_63 [1] : vector<16x16xf32> to vector<16xf32>
    %166 = vector.shape_cast %165 : vector<16xf32> to vector<16x1xf32>
    %167 = tpu.reciprocal %166 {approx = true} : vector<16x1xf32> -> vector<16x1xf32>
    %168 = vector.broadcast %167 : vector<16x1xf32> to vector<16x16xf32>
    %169 = arith.mulf %164, %168 : vector<16x16xf32>
    %cst_64 = arith.constant dense<0.000000e+00> : vector<16x32xf32>
    %170 = tpu.matmul %169, %157, %cst_64 {dimension_numbers = #tpu.dot_dimension_numbers<[1], [0], [0], [1], [0, 0, 1, 1], [], []>} : vector<16x16xf32>, vector<16x32xf32>, vector<16x32xf32> -> vector<16x32xf32>
    %171 = vector.extract_strided_slice %154 {offsets = [0, 8], sizes = [16, 8], strides = [1, 1]} : vector<16x192xf32> to vector<16x8xf32>
    %172 = vector.extract_strided_slice %154 {offsets = [0, 40], sizes = [16, 8], strides = [1, 1]} : vector<16x192xf32> to vector<16x8xf32>
    %173 = vector.extract_strided_slice %154 {offsets = [0, 96], sizes = [16, 32], strides = [1, 1]} : vector<16x192xf32> to vector<16x32xf32>
    "tpu.trace_start"() <{level = 10 : i32, message = "qe,ke->qk"}> : () -> ()
    %cst_65 = arith.constant dense<0.000000e+00> : vector<16x16xf32>
    %174 = tpu.matmul %171, %172, %cst_65 {dimension_numbers = #tpu.dot_dimension_numbers<[1], [1], [0], [0], [0, 0, 1, 0], [], []>} : vector<16x8xf32>, vector<16x8xf32>, vector<16x16xf32> -> vector<16x16xf32>
    "tpu.trace_stop"() : () -> ()
    %175 = arith.addf %174, %1 : vector<16x16xf32>
    %cst_66 = arith.constant dense<0xFF800000> : vector<16xf32>
    %176 = vector.multi_reduction <maximumf>, %175, %cst_66 [1] : vector<16x16xf32> to vector<16xf32>
    %177 = vector.shape_cast %176 : vector<16xf32> to vector<16x1xf32>
    %178 = vector.broadcast %177 : vector<16x1xf32> to vector<16x16xf32>
    %179 = arith.subf %175, %178 : vector<16x16xf32>
    %180 = math.exp %179 : vector<16x16xf32>
    %cst_67 = arith.constant dense<0.000000e+00> : vector<16xf32>
    %181 = vector.multi_reduction <add>, %180, %cst_67 [1] : vector<16x16xf32> to vector<16xf32>
    %182 = vector.shape_cast %181 : vector<16xf32> to vector<16x1xf32>
    %183 = tpu.reciprocal %182 {approx = true} : vector<16x1xf32> -> vector<16x1xf32>
    %184 = vector.broadcast %183 : vector<16x1xf32> to vector<16x16xf32>
    %185 = arith.mulf %180, %184 : vector<16x16xf32>
    %cst_68 = arith.constant dense<0.000000e+00> : vector<16x32xf32>
    %186 = tpu.matmul %185, %173, %cst_68 {dimension_numbers = #tpu.dot_dimension_numbers<[1], [0], [0], [1], [0, 0, 1, 1], [], []>} : vector<16x16xf32>, vector<16x32xf32>, vector<16x32xf32> -> vector<16x32xf32>
    %187 = arith.addf %170, %186 : vector<16x32xf32>
    %188 = vector.extract_strided_slice %154 {offsets = [0, 16], sizes = [16, 8], strides = [1, 1]} : vector<16x192xf32> to vector<16x8xf32>
    %189 = vector.extract_strided_slice %154 {offsets = [0, 48], sizes = [16, 8], strides = [1, 1]} : vector<16x192xf32> to vector<16x8xf32>
    %190 = vector.extract_strided_slice %154 {offsets = [0, 128], sizes = [16, 32], strides = [1, 1]} : vector<16x192xf32> to vector<16x32xf32>
    "tpu.trace_start"() <{level = 10 : i32, message = "qe,ke->qk"}> : () -> ()
    %cst_69 = arith.constant dense<0.000000e+00> : vector<16x16xf32>
    %191 = tpu.matmul %188, %189, %cst_69 {dimension_numbers = #tpu.dot_dimension_numbers<[1], [1], [0], [0], [0, 0, 1, 0], [], []>} : vector<16x8xf32>, vector<16x8xf32>, vector<16x16xf32> -> vector<16x16xf32>
    "tpu.trace_stop"() : () -> ()
    %192 = arith.addf %191, %1 : vector<16x16xf32>
    %cst_70 = arith.constant dense<0xFF800000> : vector<16xf32>
    %193 = vector.multi_reduction <maximumf>, %192, %cst_70 [1] : vector<16x16xf32> to vector<16xf32>
    %194 = vector.shape_cast %193 : vector<16xf32> to vector<16x1xf32>
    %195 = vector.broadcast %194 : vector<16x1xf32> to vector<16x16xf32>
    %196 = arith.subf %192, %195 : vector<16x16xf32>
    %197 = math.exp %196 : vector<16x16xf32>
    %cst_71 = arith.constant dense<0.000000e+00> : vector<16xf32>
    %198 = vector.multi_reduction <add>, %197, %cst_71 [1] : vector<16x16xf32> to vector<16xf32>
    %199 = vector.shape_cast %198 : vector<16xf32> to vector<16x1xf32>
    %200 = tpu.reciprocal %199 {approx = true} : vector<16x1xf32> -> vector<16x1xf32>
    %201 = vector.broadcast %200 : vector<16x1xf32> to vector<16x16xf32>
    %202 = arith.mulf %197, %201 : vector<16x16xf32>
    %cst_72 = arith.constant dense<0.000000e+00> : vector<16x32xf32>
    %203 = tpu.matmul %202, %190, %cst_72 {dimension_numbers = #tpu.dot_dimension_numbers<[1], [0], [0], [1], [0, 0, 1, 1], [], []>} : vector<16x16xf32>, vector<16x32xf32>, vector<16x32xf32> -> vector<16x32xf32>
    %204 = arith.addf %187, %203 : vector<16x32xf32>
    %205 = vector.extract_strided_slice %154 {offsets = [0, 24], sizes = [16, 8], strides = [1, 1]} : vector<16x192xf32> to vector<16x8xf32>
    %206 = vector.extract_strided_slice %154 {offsets = [0, 56], sizes = [16, 8], strides = [1, 1]} : vector<16x192xf32> to vector<16x8xf32>
    %207 = vector.extract_strided_slice %154 {offsets = [0, 160], sizes = [16, 32], strides = [1, 1]} : vector<16x192xf32> to vector<16x32xf32>
    "tpu.trace_start"() <{level = 10 : i32, message = "qe,ke->qk"}> : () -> ()
    %cst_73 = arith.constant dense<0.000000e+00> : vector<16x16xf32>
    %208 = tpu.matmul %205, %206, %cst_73 {dimension_numbers = #tpu.dot_dimension_numbers<[1], [1], [0], [0], [0, 0, 1, 0], [], []>} : vector<16x8xf32>, vector<16x8xf32>, vector<16x16xf32> -> vector<16x16xf32>
    "tpu.trace_stop"() : () -> ()
    %209 = arith.addf %208, %1 : vector<16x16xf32>
    %cst_74 = arith.constant dense<0xFF800000> : vector<16xf32>
    %210 = vector.multi_reduction <maximumf>, %209, %cst_74 [1] : vector<16x16xf32> to vector<16xf32>
    %211 = vector.shape_cast %210 : vector<16xf32> to vector<16x1xf32>
    %212 = vector.broadcast %211 : vector<16x1xf32> to vector<16x16xf32>
    %213 = arith.subf %209, %212 : vector<16x16xf32>
    %214 = math.exp %213 : vector<16x16xf32>
    %cst_75 = arith.constant dense<0.000000e+00> : vector<16xf32>
    %215 = vector.multi_reduction <add>, %214, %cst_75 [1] : vector<16x16xf32> to vector<16xf32>
    %216 = vector.shape_cast %215 : vector<16xf32> to vector<16x1xf32>
    %217 = tpu.reciprocal %216 {approx = true} : vector<16x1xf32> -> vector<16x1xf32>
    %218 = vector.broadcast %217 : vector<16x1xf32> to vector<16x16xf32>
    %219 = arith.mulf %214, %218 : vector<16x16xf32>
    %cst_76 = arith.constant dense<0.000000e+00> : vector<16x32xf32>
    %220 = tpu.matmul %219, %207, %cst_76 {dimension_numbers = #tpu.dot_dimension_numbers<[1], [0], [0], [1], [0, 0, 1, 1], [], []>} : vector<16x16xf32>, vector<16x32xf32>, vector<16x32xf32> -> vector<16x32xf32>
    %221 = arith.addf %204, %220 : vector<16x32xf32>
    %c6 = arith.constant 6 : index
    %c0_77 = arith.constant 0 : index
    %222 = vector.load %arg8[%c6, %c0_77] : memref<12x32xf32, #tpu.memory_space<vmem>>, vector<1x32xf32>
    %223 = vector.broadcast %222 : vector<1x32xf32> to vector<16x32xf32>
    %224 = arith.addf %221, %223 : vector<16x32xf32>
    %225 = arith.addf %147, %224 : vector<16x32xf32>
    %c7 = arith.constant 7 : index
    %c0_78 = arith.constant 0 : index
    %226 = vector.load %arg8[%c7, %c0_78] : memref<12x32xf32, #tpu.memory_space<vmem>>, vector<1x32xf32>
    %c8 = arith.constant 8 : index
    %c0_79 = arith.constant 0 : index
    %227 = vector.load %arg8[%c8, %c0_79] : memref<12x32xf32, #tpu.memory_space<vmem>>, vector<1x32xf32>
    %cst_80 = arith.constant dense<0.000000e+00> : vector<16xf32>
    %228 = vector.multi_reduction <add>, %225, %cst_80 [1] : vector<16x32xf32> to vector<16xf32>
    %229 = vector.shape_cast %228 : vector<16xf32> to vector<16x1xf32>
    %cst_81 = arith.constant 3.200000e+01 : f32
    %230 = vector.broadcast %cst_81 : f32 to vector<16x1xf32>
    %231 = arith.divf %229, %230 : vector<16x1xf32>
    %232 = vector.broadcast %231 : vector<16x1xf32> to vector<16x32xf32>
    %233 = arith.subf %225, %232 : vector<16x32xf32>
    %234 = vector.broadcast %231 : vector<16x1xf32> to vector<16x32xf32>
    %235 = arith.subf %225, %234 : vector<16x32xf32>
    %236 = arith.mulf %233, %235 : vector<16x32xf32>
    %cst_82 = arith.constant dense<0.000000e+00> : vector<16xf32>
    %237 = vector.multi_reduction <add>, %236, %cst_82 [1] : vector<16x32xf32> to vector<16xf32>
    %238 = vector.shape_cast %237 : vector<16xf32> to vector<16x1xf32>
    %cst_83 = arith.constant 3.200000e+01 : f32
    %239 = vector.broadcast %cst_83 : f32 to vector<16x1xf32>
    %240 = arith.divf %238, %239 : vector<16x1xf32>
    %241 = vector.broadcast %231 : vector<16x1xf32> to vector<16x32xf32>
    %242 = arith.subf %225, %241 : vector<16x32xf32>
    %cst_84 = arith.constant 9.99999974E-6 : f32
    %243 = vector.broadcast %cst_84 : f32 to vector<16x1xf32>
    %244 = arith.addf %240, %243 : vector<16x1xf32>
    %245 = math.rsqrt %244 : vector<16x1xf32>
    %246 = vector.broadcast %245 : vector<16x1xf32> to vector<16x32xf32>
    %247 = arith.mulf %242, %246 : vector<16x32xf32>
    %248 = vector.broadcast %226 : vector<1x32xf32> to vector<16x32xf32>
    %249 = arith.mulf %247, %248 : vector<16x32xf32>
    %250 = vector.broadcast %227 : vector<1x32xf32> to vector<16x32xf32>
    %251 = arith.addf %249, %250 : vector<16x32xf32>
    %c1_85 = arith.constant 1 : index
    %c0_86 = arith.constant 0 : index
    %c0_87 = arith.constant 0 : index
    %252 = vector.load %arg5[%c1_85, %c0_86, %c0_87] : memref<2x32x64xf32, #tpu.memory_space<vmem>>, vector<1x32x64xf32>
    %253 = vector.shape_cast %252 : vector<1x32x64xf32> to vector<32x64xf32>
    %cst_88 = arith.constant dense<0.000000e+00> : vector<16x64xf32>
    %254 = tpu.matmul %251, %253, %cst_88 {dimension_numbers = #tpu.dot_dimension_numbers<[1], [0], [0], [1], [0, 0, 1, 1], [], []>} : vector<16x32xf32>, vector<32x64xf32>, vector<16x64xf32> -> vector<16x64xf32>
    %c1_89 = arith.constant 1 : index
    %c0_90 = arith.constant 0 : index
    %c0_91 = arith.constant 0 : index
    %255 = vector.load %arg6[%c1_89, %c0_90, %c0_91] : memref<2x1x64xf32, #tpu.memory_space<vmem>>, vector<1x1x64xf32>
    %256 = vector.shape_cast %255 : vector<1x1x64xf32> to vector<1x64xf32>
    %257 = vector.broadcast %256 : vector<1x64xf32> to vector<16x64xf32>
    %258 = arith.addf %254, %257 : vector<16x64xf32>
    %cst_92 = arith.constant 0.000000e+00 : f32
    %259 = vector.broadcast %cst_92 : f32 to vector<16x64xf32>
    %260 = arith.maximumf %258, %259 : vector<16x64xf32>
    %c1_93 = arith.constant 1 : index
    %c0_94 = arith.constant 0 : index
    %c0_95 = arith.constant 0 : index
    %261 = vector.load %arg7[%c1_93, %c0_94, %c0_95] : memref<2x64x32xf32, #tpu.memory_space<vmem>>, vector<1x64x32xf32>
    %262 = vector.shape_cast %261 : vector<1x64x32xf32> to vector<64x32xf32>
    %cst_96 = arith.constant dense<0.000000e+00> : vector<16x32xf32>
    %263 = tpu.matmul %260, %262, %cst_96 {dimension_numbers = #tpu.dot_dimension_numbers<[1], [0], [0], [1], [0, 0, 1, 1], [], []>} : vector<16x64xf32>, vector<64x32xf32>, vector<16x32xf32> -> vector<16x32xf32>
    %c9 = arith.constant 9 : index
    %c0_97 = arith.constant 0 : index
    %264 = vector.load %arg8[%c9, %c0_97] : memref<12x32xf32, #tpu.memory_space<vmem>>, vector<1x32xf32>
    %265 = vector.broadcast %264 : vector<1x32xf32> to vector<16x32xf32>
    %266 = arith.addf %263, %265 : vector<16x32xf32>
    %267 = arith.addf %251, %266 : vector<16x32xf32>
    %c10 = arith.constant 10 : index
    %c0_98 = arith.constant 0 : index
    %268 = vector.load %arg8[%c10, %c0_98] : memref<12x32xf32, #tpu.memory_space<vmem>>, vector<1x32xf32>
    %c11 = arith.constant 11 : index
    %c0_99 = arith.constant 0 : index
    %269 = vector.load %arg8[%c11, %c0_99] : memref<12x32xf32, #tpu.memory_space<vmem>>, vector<1x32xf32>
    %cst_100 = arith.constant dense<0.000000e+00> : vector<16xf32>
    %270 = vector.multi_reduction <add>, %267, %cst_100 [1] : vector<16x32xf32> to vector<16xf32>
    %271 = vector.shape_cast %270 : vector<16xf32> to vector<16x1xf32>
    %cst_101 = arith.constant 3.200000e+01 : f32
    %272 = vector.broadcast %cst_101 : f32 to vector<16x1xf32>
    %273 = arith.divf %271, %272 : vector<16x1xf32>
    %274 = vector.broadcast %273 : vector<16x1xf32> to vector<16x32xf32>
    %275 = arith.subf %267, %274 : vector<16x32xf32>
    %276 = vector.broadcast %273 : vector<16x1xf32> to vector<16x32xf32>
    %277 = arith.subf %267, %276 : vector<16x32xf32>
    %278 = arith.mulf %275, %277 : vector<16x32xf32>
    %cst_102 = arith.constant dense<0.000000e+00> : vector<16xf32>
    %279 = vector.multi_reduction <add>, %278, %cst_102 [1] : vector<16x32xf32> to vector<16xf32>
    %280 = vector.shape_cast %279 : vector<16xf32> to vector<16x1xf32>
    %cst_103 = arith.constant 3.200000e+01 : f32
    %281 = vector.broadcast %cst_103 : f32 to vector<16x1xf32>
    %282 = arith.divf %280, %281 : vector<16x1xf32>
    %283 = vector.broadcast %273 : vector<16x1xf32> to vector<16x32xf32>
    %284 = arith.subf %267, %283 : vector<16x32xf32>
    %cst_104 = arith.constant 9.99999974E-6 : f32
    %285 = vector.broadcast %cst_104 : f32 to vector<16x1xf32>
    %286 = arith.addf %282, %285 : vector<16x1xf32>
    %287 = math.rsqrt %286 : vector<16x1xf32>
    %288 = vector.broadcast %287 : vector<16x1xf32> to vector<16x32xf32>
    %289 = arith.mulf %284, %288 : vector<16x32xf32>
    %290 = vector.broadcast %268 : vector<1x32xf32> to vector<16x32xf32>
    %291 = arith.mulf %289, %290 : vector<16x32xf32>
    %292 = vector.broadcast %269 : vector<1x32xf32> to vector<16x32xf32>
    %293 = arith.addf %291, %292 : vector<16x32xf32>
    %c0_105 = arith.constant 0 : index
    %c0_106 = arith.constant 0 : index
    %294 = vector.load %arg2[%c0_105, %c0_106] : memref<8x16xf32, #tpu.memory_space<vmem>>, vector<8x16xf32>
    %cst_107 = arith.constant dense<0.000000e+00> : vector<8x32xf32>
    %295 = tpu.matmul %294, %293, %cst_107 {dimension_numbers = #tpu.dot_dimension_numbers<[1], [0], [0], [1], [0, 0, 1, 1], [], []>} : vector<8x16xf32>, vector<16x32xf32>, vector<8x32xf32> -> vector<8x32xf32>
    %c0_108 = arith.constant 0 : index
    %c0_109 = arith.constant 0 : index
    %296 = vector.load %arg9[%c0_108, %c0_109] : memref<2x32xf32, #tpu.memory_space<vmem>>, vector<1x32xf32>
    %c1_110 = arith.constant 1 : index
    %c0_111 = arith.constant 0 : index
    %297 = vector.load %arg9[%c1_110, %c0_111] : memref<2x32xf32, #tpu.memory_space<vmem>>, vector<1x32xf32>
    %cst_112 = arith.constant dense<0.000000e+00> : vector<8xf32>
    %298 = vector.multi_reduction <add>, %295, %cst_112 [1] : vector<8x32xf32> to vector<8xf32>
    %299 = vector.shape_cast %298 : vector<8xf32> to vector<8x1xf32>
    %cst_113 = arith.constant 3.200000e+01 : f32
    %300 = vector.broadcast %cst_113 : f32 to vector<8x1xf32>
    %301 = arith.divf %299, %300 : vector<8x1xf32>
    %302 = vector.broadcast %301 : vector<8x1xf32> to vector<8x32xf32>
    %303 = arith.subf %295, %302 : vector<8x32xf32>
    %304 = vector.broadcast %301 : vector<8x1xf32> to vector<8x32xf32>
    %305 = arith.subf %295, %304 : vector<8x32xf32>
    %306 = arith.mulf %303, %305 : vector<8x32xf32>
    %cst_114 = arith.constant dense<0.000000e+00> : vector<8xf32>
    %307 = vector.multi_reduction <add>, %306, %cst_114 [1] : vector<8x32xf32> to vector<8xf32>
    %308 = vector.shape_cast %307 : vector<8xf32> to vector<8x1xf32>
    %cst_115 = arith.constant 3.200000e+01 : f32
    %309 = vector.broadcast %cst_115 : f32 to vector<8x1xf32>
    %310 = arith.divf %308, %309 : vector<8x1xf32>
    %311 = vector.broadcast %301 : vector<8x1xf32> to vector<8x32xf32>
    %312 = arith.subf %295, %311 : vector<8x32xf32>
    %cst_116 = arith.constant 9.99999974E-6 : f32
    %313 = vector.broadcast %cst_116 : f32 to vector<8x1xf32>
    %314 = arith.addf %310, %313 : vector<8x1xf32>
    %315 = math.rsqrt %314 : vector<8x1xf32>
    %316 = vector.broadcast %315 : vector<8x1xf32> to vector<8x32xf32>
    %317 = arith.mulf %312, %316 : vector<8x32xf32>
    %318 = vector.broadcast %296 : vector<1x32xf32> to vector<8x32xf32>
    %319 = arith.mulf %317, %318 : vector<8x32xf32>
    %320 = vector.broadcast %297 : vector<1x32xf32> to vector<8x32xf32>
    %321 = arith.addf %319, %320 : vector<8x32xf32>
    %c0_117 = arith.constant 0 : index
    %c0_118 = arith.constant 0 : index
    %322 = vector.load %arg10[%c0_117, %c0_118] : memref<32x128xf32, #tpu.memory_space<vmem>>, vector<32x128xf32>
    %cst_119 = arith.constant dense<0.000000e+00> : vector<8x128xf32>
    %323 = tpu.matmul %321, %322, %cst_119 {dimension_numbers = #tpu.dot_dimension_numbers<[1], [0], [0], [1], [0, 0, 1, 1], [], []>} : vector<8x32xf32>, vector<32x128xf32>, vector<8x128xf32> -> vector<8x128xf32>
    %c0_120 = arith.constant 0 : index
    %c0_121 = arith.constant 0 : index
    %324 = vector.load %arg11[%c0_120, %c0_121] : memref<1x128xf32, #tpu.memory_space<vmem>>, vector<1x128xf32>
    %325 = vector.broadcast %324 : vector<1x128xf32> to vector<8x128xf32>
    %326 = arith.addf %323, %325 : vector<8x128xf32>
    %c0_122 = arith.constant 0 : index
    %c0_123 = arith.constant 0 : index
    %327 = vector.load %arg12[%c0_122, %c0_123] : memref<8x128xf32, #tpu.memory_space<vmem>>, vector<8x128xf32>
    tpu.vector_store %arg12[%c0_122, %c0_123], %326 {strides = array<i32>} : memref<8x128xf32, #tpu.memory_space<vmem>>, vector<8x128xf32>,
    return
  }
}

</mosaic_0001>

<llo_original>
// kernel: forward.1
$region0: #{forward.1}
  #allocation0 [shape = 'u32[]', space=smem, size = 0x4, offset = 0x4, fixed_abs, tag = 'smem constant byte address 0x4 - core index']
  #allocation1 [shape = 'u32[72,128]{1,0:T(1,128)}', space=vmem, size = 0x9000, scoped, tag = 'internal scratch']
  %s0 = inlined_call_operand.vmem [shape: f32[16,32], index: 0, kind: input, shape index: {}]
  %s1 = inlined_call_operand.vmem [shape: f32[16,16], index: 1, kind: input, shape index: {}]
  %s2 = inlined_call_operand.vmem [shape: f32[8,16], index: 2, kind: input, shape index: {}]
  %s3 = inlined_call_operand.vmem [shape: f32[2,32,192], index: 3, kind: input, shape index: {}]
  %s4 = inlined_call_operand.vmem [shape: f32[2,1,192], index: 4, kind: input, shape index: {}]
  %s5 = inlined_call_operand.vmem [shape: f32[2,32,64], index: 5, kind: input, shape index: {}]
  %s6 = inlined_call_operand.vmem [shape: f32[2,1,64], index: 6, kind: input, shape index: {}]
  %s7 = inlined_call_operand.vmem [shape: f32[2,64,32], index: 7, kind: input, shape index: {}]
  %s8 = inlined_call_operand.vmem [shape: f32[12,32], index: 8, kind: input, shape index: {}]
  %s9 = inlined_call_operand.vmem [shape: f32[2,32], index: 9, kind: input, shape index: {}]
  %s10 = inlined_call_operand.vmem [shape: f32[32,128], index: 10, kind: input, shape index: {}]
  %s11 = inlined_call_operand.vmem [shape: f32[1,128], index: 11, kind: input, shape index: {}]
  %s12 = inlined_call_operand.vmem [shape: f32[8,128], index: 12, kind: output, shape index: {}]
  %s13 = sld [smem:[#allocation0]]
  $region58: #{forward.1} parent=0
    _
  %s15 = ssub.s32 1, %s13
  %s16 = scalar_select 0, %s15, %s13
  // Predicated region
  $region2: #{forward.1} parent=0 // pred_check
    _
  $region3: #{forward.1} parent=0 // pred_check_branch
    %18 = sbr.rel (0) target = $region5
  $region4: #{forward.1} parent=0 // pred_region
    _
  $region5: #{forward.1} parent=0 // pred_fallthru
    _
  // Predicated region
  $region6: #{forward.1} parent=0 // pred_check
    _
  $region7: #{forward.1} parent=0 // pred_check_branch
    %20 = sbr.rel (0) target = $region9
  $region8: #{forward.1} parent=0 // pred_region
    _
  $region9: #{forward.1} parent=0 // pred_fallthru
    _
  // Predicated region
  $region10: #{forward.1} parent=0 // pred_check
    _
  $region11: #{forward.1} parent=0 // pred_check_branch
    %22 = sbr.rel (0) target = $region13
  $region12: #{forward.1} parent=0 // pred_region
    _
  $region13: #{forward.1} parent=0 // pred_fallthru
    _
  // Predicated region
  $region14: #{forward.1} parent=0 // pred_check
    _
  $region15: #{forward.1} parent=0 // pred_check_branch
    %24 = sbr.rel (0) target = $region17
  $region16: #{forward.1} parent=0 // pred_region
    _
  $region17: #{forward.1} parent=0 // pred_fallthru
    _
  // Predicated region
  $region18: #{forward.1} parent=0 // pred_check
    _
  $region19: #{forward.1} parent=0 // pred_check_branch
    %26 = sbr.rel (0) target = $region21
  $region20: #{forward.1} parent=0 // pred_region
    _
  $region21: #{forward.1} parent=0 // pred_fallthru
    _
  // Predicated region
  $region22: #{forward.1} parent=0 // pred_check
    _
  $region23: #{forward.1} parent=0 // pred_check_branch
    %28 = sbr.rel (0) target = $region25
  $region24: #{forward.1} parent=0 // pred_region
    _
  $region25: #{forward.1} parent=0 // pred_fallthru
    _
  // Predicated region
  $region26: #{forward.1} parent=0 // pred_check
    _
  $region27: #{forward.1} parent=0 // pred_check_branch
    %30 = sbr.rel (0) target = $region29
  $region28: #{forward.1} parent=0 // pred_region
    _
  $region29: #{forward.1} parent=0 // pred_fallthru
    _
  // Predicated region
  $region30: #{forward.1} parent=0 // pred_check
    _
  $region31: #{forward.1} parent=0 // pred_check_branch
    %32 = sbr.rel (0) target = $region33
  $region32: #{forward.1} parent=0 // pred_region
    _
  $region33: #{forward.1} parent=0 // pred_fallthru
    _
  // Predicated region
  $region34: #{forward.1} parent=0 // pred_check
    _
  $region35: #{forward.1} parent=0 // pred_check_branch
    %34 = sbr.rel (0) target = $region37
  $region36: #{forward.1} parent=0 // pred_region
    _
  $region37: #{forward.1} parent=0 // pred_fallthru
    _
  // Predicated region
  $region38: #{forward.1} parent=0 // pred_check
    _
  $region39: #{forward.1} parent=0 // pred_check_branch
    %36 = sbr.rel (0) target = $region41
  $region40: #{forward.1} parent=0 // pred_region
    _
  $region41: #{forward.1} parent=0 // pred_fallthru
    _
  // Predicated region
  $region42: #{forward.1} parent=0 // pred_check
    _
  $region43: #{forward.1} parent=0 // pred_check_branch
    %38 = sbr.rel (0) target = $region45
  $region44: #{forward.1} parent=0 // pred_region
    _
  $region45: #{forward.1} parent=0 // pred_fallthru
    _
  // Predicated region
  $region46: #{forward.1} parent=0 // pred_check
    _
  $region47: #{forward.1} parent=0 // pred_check_branch
    %40 = sbr.rel (0) target = $region49
  $region48: #{forward.1} parent=0 // pred_region
    _
  $region49: #{forward.1} parent=0 // pred_fallthru
    _
  %v41 = vld [vmem:[%s0] sm:$0xff]
  %v42 = vld [vmem:[%s0 + $0x8] sm:$0xff]
  %v43 = vld [vmem:[%s1] sm:$0xff]
  %v44 = vld [vmem:[%s1 + $0x8] sm:$0xff]
  %v45 = vld [vmem:[%s3] sm:$0xff]
  %v46 = vld [vmem:[%s3 + $0x8] sm:$0xff]
  %v47 = vld [vmem:[%s3 + $0x10] sm:$0xff]
  %v48 = vld [vmem:[%s3 + $0x18] sm:$0xff]
  %v49 = vld [vmem:[%s3 + $0x20] sm:$0xff]
  %v50 = vld [vmem:[%s3 + $0x28] sm:$0xff]
  %v51 = vld [vmem:[%s3 + $0x30] sm:$0xff]
  %v52 = vld [vmem:[%s3 + $0x38] sm:$0xff]
  %v53 = vld [vmem:[%s4] sm:$0x3]
  %v55 = vperm.slane %v53, 0
  %v56 = vperm.slane %v53, 1
  %vm59 = vcmask 261120
  %v61 = vsel %vm59, %v41, 0
  %v64 = vsel %vm59, %v42, 0
  %66 = vmatpush.msra.mxu0 0.0
  %67 = vmatpush.msra.mxu0 0.0
  %68 = vmatpush.msra.mxu0 0.0
  %69 = vmatpush.msra.mxu0 0.0
  %70 = vmatpush.msra.mxu0 0.0
  %71 = vmatpush.msra.mxu0 0.0
  %72 = vmatpush.msra.mxu0 0.0
  %73 = vmatpush.msra.mxu0 0.0
  %74 = vmatpush.msra.mxu0 0.0
  %75 = vmatpush.msra.mxu0 0.0
  %76 = vmatpush.msra.mxu0 0.0
  %77 = vmatpush.msra.mxu0 0.0
  %78 = vmatpush.msra.mxu0 %v51
  %79 = vmatpush.msra.mxu0 %v49
  %80 = vmatpush.msra.mxu0 %v47
  %81 = vmatpush.msra.mxu0 %v45
  %82 = vmatmul.f32.gmra.mxu0 %v61
  %v83 = vpop.f32.mrf.mxu0
  %v84 = vadd.f32 %v55, %v83
  %85 = vmatmul.f32.gmra.mxu0 %v64
  %v86 = vpop.f32.mrf.mxu0
  %v87 = vadd.f32 %v55, %v86
  %88 = vdwg.mxu0
  %89 = vmatpush.msra.mxu0 0.0
  %90 = vmatpush.msra.mxu0 0.0
  %91 = vmatpush.msra.mxu0 0.0
  %92 = vmatpush.msra.mxu0 0.0
  %93 = vmatpush.msra.mxu0 0.0
  %94 = vmatpush.msra.mxu0 0.0
  %95 = vmatpush.msra.mxu0 0.0
  %96 = vmatpush.msra.mxu0 0.0
  %97 = vmatpush.msra.mxu0 0.0
  %98 = vmatpush.msra.mxu0 0.0
  %99 = vmatpush.msra.mxu0 0.0
  %100 = vmatpush.msra.mxu0 0.0
  %101 = vmatpush.msra.mxu0 %v52
  %102 = vmatpush.msra.mxu0 %v50
  %103 = vmatpush.msra.mxu0 %v48
  %104 = vmatpush.msra.mxu0 %v46
  %105 = vmatmul.f32.gmra.mxu0 %v61
  %v106 = vpop.f32.mrf.mxu0
  %v107 = vadd.f32 %v56, %v106
  %108 = vmatmul.f32.gmra.mxu0 %v64
  %v109 = vpop.f32.mrf.mxu0
  %v110 = vadd.f32 %v56, %v109
  %111 = vdwg.mxu0
  %114 = vrot.lane.b32.xlu0 %v84, 96
  %v115 = vpop.permute.xlu0 %114
  %116 = vrot.lane.b32.xlu0 %v87, 96
  %v117 = vpop.permute.xlu0 %116
  %vm118 = vcmask 64512
  %v119 = vsel %vm118, %v84, 0
  %v121 = vsel %vm118, %v87, 0
  %v123 = vsel %vm118, %v115, 0
  %v125 = vsel %vm118, %v117, 0
  %127 = vmatpush.xpose.msra.mxu0 0.0
  %128 = vmatpush.xpose.msra.mxu0 0.0
  %129 = vmatpush.xpose.msra.mxu0 0.0
  %130 = vmatpush.xpose.msra.mxu0 0.0
  %131 = vmatpush.xpose.msra.mxu0 0.0
  %132 = vmatpush.xpose.msra.mxu0 0.0
  %133 = vmatpush.xpose.msra.mxu0 0.0
  %134 = vmatpush.xpose.msra.mxu0 0.0
  %135 = vmatpush.xpose.msra.mxu0 0.0
  %136 = vmatpush.xpose.msra.mxu0 0.0
  %137 = vmatpush.xpose.msra.mxu0 0.0
  %138 = vmatpush.xpose.msra.mxu0 0.0
  %139 = vmatpush.xpose.msra.mxu0 0.0
  %140 = vmatpush.xpose.msra.mxu0 0.0
  %141 = vmatpush.xpose.msra.mxu0 %v125
  %142 = vmatpush.xpose.msra.mxu0 %v123
  %143 = vmatmul.f32.gmra.mxu0 %v119
  %v144 = vpop.f32.mrf.mxu0
  %v145 = vadd.f32 %v43, %v144
  %146 = vmatmul.f32.gmra.mxu0 %v121
  %v147 = vpop.f32.mrf.mxu0
  %v148 = vadd.f32 %v44, %v147
  %149 = vdwg.mxu0
  %vm150 = vcmask 130048
  %v151 = vsel %vm150, %v145, -inf
  %152 = vmax.xlane.f32.xlu0 %v151
  %v153 = vpop.xlane.xlu0 %152
  %v154 = vsel %vm150, %v148, -inf
  %155 = vmax.xlane.f32.xlu0 %v154
  %v156 = vpop.xlane.xlu0 %155
  %v157 = vsub.f32 %v145, %v153
  %v158 = vsub.f32 %v148, %v156
  %v159 = vmul.f32 %v157, 1.442695
  %v160 = vpow.pop %v159
  %v161 = vmul.f32 %v158, 1.442695
  %v162 = vpow.pop %v161
  %v163 = vsel %vm150, %v160, 0.0
  %164 = vadd.xlane.f32.xlu0 %v163
  %v165 = vpop.xlane.xlu0 %164
  %v166 = vsel %vm150, %v162, 0.0
  %167 = vadd.xlane.f32.xlu0 %v166
  %v168 = vpop.xlane.xlu0 %167
  %v169 = vrcp.pop %v165
  %v170 = vrcp.pop %v168
  %v171 = vmul.f32 %v160, %v169
  %v172 = vmul.f32 %v162, %v170
  %173 = vrot.lane.b32.xlu0 %v84, 120
  %v174 = vpop.permute.xlu0 %173
  %175 = vrot.lane.b32.xlu0 %v87, 120
  %v176 = vpop.permute.xlu0 %175
  %177 = vrot.lane.b32.xlu0 %v84, 88
  %v178 = vpop.permute.xlu0 %177
  %179 = vrot.lane.b32.xlu0 %v87, 88
  %v180 = vpop.permute.xlu0 %179
  %v181 = vsel %vm118, %v174, 0
  %v183 = vsel %vm118, %v176, 0
  %v185 = vsel %vm118, %v178, 0
  %v187 = vsel %vm118, %v180, 0
  %189 = vmatpush.xpose.msra.mxu0 0.0
  %190 = vmatpush.xpose.msra.mxu0 0.0
  %191 = vmatpush.xpose.msra.mxu0 0.0
  %192 = vmatpush.xpose.msra.mxu0 0.0
  %193 = vmatpush.xpose.msra.mxu0 0.0
  %194 = vmatpush.xpose.msra.mxu0 0.0
  %195 = vmatpush.xpose.msra.mxu0 0.0
  %196 = vmatpush.xpose.msra.mxu0 0.0
  %197 = vmatpush.xpose.msra.mxu0 0.0
  %198 = vmatpush.xpose.msra.mxu0 0.0
  %199 = vmatpush.xpose.msra.mxu0 0.0
  %200 = vmatpush.xpose.msra.mxu0 0.0
  %201 = vmatpush.xpose.msra.mxu0 0.0
  %202 = vmatpush.xpose.msra.mxu0 0.0
  %203 = vmatpush.xpose.msra.mxu0 %v187
  %204 = vmatpush.xpose.msra.mxu0 %v185
  %205 = vmatmul.f32.gmra.mxu0 %v181
  %v206 = vpop.f32.mrf.mxu0
  %v207 = vadd.f32 %v43, %v206
  %208 = vmatmul.f32.gmra.mxu0 %v183
  %v209 = vpop.f32.mrf.mxu0
  %v210 = vadd.f32 %v44, %v209
  %211 = vdwg.mxu0
  %v212 = vsel %vm150, %v207, -inf
  %213 = vmax.xlane.f32.xlu0 %v212
  %v214 = vpop.xlane.xlu0 %213
  %v215 = vsel %vm150, %v210, -inf
  %216 = vmax.xlane.f32.xlu0 %v215
  %v217 = vpop.xlane.xlu0 %216
  %v218 = vsub.f32 %v207, %v214
  %v219 = vsub.f32 %v210, %v217
  %v220 = vmul.f32 %v218, 1.442695
  %v221 = vpow.pop %v220
  %v222 = vmul.f32 %v219, 1.442695
  %v223 = vpow.pop %v222
  %v224 = vsel %vm150, %v221, 0.0
  %225 = vadd.xlane.f32.xlu0 %v224
  %v226 = vpop.xlane.xlu0 %225
  %v227 = vsel %vm150, %v223, 0.0
  %228 = vadd.xlane.f32.xlu0 %v227
  %v229 = vpop.xlane.xlu0 %228
  %v230 = vrcp.pop %v226
  %v231 = vrcp.pop %v229
  %v232 = vmul.f32 %v221, %v230
  %v233 = vmul.f32 %v223, %v231
  %234 = vrot.lane.b32.xlu0 %v84, 32
  %v235 = vpop.permute.xlu0 %234
  %236 = vrot.lane.b32.xlu0 %v87, 32
  %v237 = vpop.permute.xlu0 %236
  %v241 = vsel %vm150, %v232, 0
  %v244 = vsel %vm150, %v233, 0
  %246 = vmatpush.msra.mxu0 0.0
  %247 = vmatpush.msra.mxu0 0.0
  %248 = vmatpush.msra.mxu0 0.0
  %249 = vmatpush.msra.mxu0 0.0
  %250 = vmatpush.msra.mxu0 0.0
  %251 = vmatpush.msra.mxu0 0.0
  %252 = vmatpush.msra.mxu0 0.0
  %253 = vmatpush.msra.mxu0 0.0
  %254 = vmatpush.msra.mxu0 0.0
  %255 = vmatpush.msra.mxu0 0.0
  %256 = vmatpush.msra.mxu0 0.0
  %257 = vmatpush.msra.mxu0 0.0
  %258 = vmatpush.msra.mxu0 0.0
  %259 = vmatpush.msra.mxu0 0.0
  %260 = vmatpush.msra.mxu0 %v237
  %261 = vmatpush.msra.mxu0 %v235
  %262 = vmatmul.f32.gmra.mxu0 %v241
  %v263 = vpop.f32.mrf.mxu0
  %v264 = vadd.f32 0.0, %v263
  %265 = vmatmul.f32.gmra.mxu0 %v244
  %v266 = vpop.f32.mrf.mxu0
  %v267 = vadd.f32 0.0, %v266
  %268 = vdwg.mxu0
  %269 = vrot.lane.b32.xlu0 %v84, 64
  %v270 = vpop.permute.xlu0 %269
  %271 = vrot.lane.b32.xlu0 %v87, 64
  %v272 = vpop.permute.xlu0 %271
  %v276 = vsel %vm150, %v171, 0
  %v279 = vsel %vm150, %v172, 0
  %281 = vmatpush.msra.mxu0 0.0
  %282 = vmatpush.msra.mxu0 0.0
  %283 = vmatpush.msra.mxu0 0.0
  %284 = vmatpush.msra.mxu0 0.0
  %285 = vmatpush.msra.mxu0 0.0
  %286 = vmatpush.msra.mxu0 0.0
  %287 = vmatpush.msra.mxu0 0.0
  %288 = vmatpush.msra.mxu0 0.0
  %289 = vmatpush.msra.mxu0 0.0
  %290 = vmatpush.msra.mxu0 0.0
  %291 = vmatpush.msra.mxu0 0.0
  %292 = vmatpush.msra.mxu0 0.0
  %293 = vmatpush.msra.mxu0 0.0
  %294 = vmatpush.msra.mxu0 0.0
  %295 = vmatpush.msra.mxu0 %v272
  %296 = vmatpush.msra.mxu0 %v270
  %297 = vmatmul.f32.gmra.mxu0 %v276
  %v298 = vpop.f32.mrf.mxu0
  %v299 = vadd.f32 %v264, %v298
  %300 = vmatmul.f32.gmra.mxu0 %v279
  %v301 = vpop.f32.mrf.mxu0
  %v302 = vadd.f32 %v267, %v301
  %303 = vdwg.mxu0
  %304 = vrot.lane.b32.xlu0 %v84, 112
  %v305 = vpop.permute.xlu0 %304
  %306 = vrot.lane.b32.xlu0 %v87, 112
  %v307 = vpop.permute.xlu0 %306
  %308 = vrot.lane.b32.xlu0 %v84, 80
  %v309 = vpop.permute.xlu0 %308
  %310 = vrot.lane.b32.xlu0 %v87, 80
  %v311 = vpop.permute.xlu0 %310
  %v312 = vsel %vm118, %v305, 0
  %v314 = vsel %vm118, %v307, 0
  %v316 = vsel %vm118, %v309, 0
  %v318 = vsel %vm118, %v311, 0
  %320 = vmatpush.xpose.msra.mxu0 0.0
  %321 = vmatpush.xpose.msra.mxu0 0.0
  %322 = vmatpush.xpose.msra.mxu0 0.0
  %323 = vmatpush.xpose.msra.mxu0 0.0
  %324 = vmatpush.xpose.msra.mxu0 0.0
  %325 = vmatpush.xpose.msra.mxu0 0.0
  %326 = vmatpush.xpose.msra.mxu0 0.0
  %327 = vmatpush.xpose.msra.mxu0 0.0
  %328 = vmatpush.xpose.msra.mxu0 0.0
  %329 = vmatpush.xpose.msra.mxu0 0.0
  %330 = vmatpush.xpose.msra.mxu0 0.0
  %331 = vmatpush.xpose.msra.mxu0 0.0
  %332 = vmatpush.xpose.msra.mxu0 0.0
  %333 = vmatpush.xpose.msra.mxu0 0.0
  %334 = vmatpush.xpose.msra.mxu0 %v318
  %335 = vmatpush.xpose.msra.mxu0 %v316
  %336 = vmatmul.f32.gmra.mxu0 %v312
  %v337 = vpop.f32.mrf.mxu0
  %v338 = vadd.f32 %v43, %v337
  %339 = vmatmul.f32.gmra.mxu0 %v314
  %v340 = vpop.f32.mrf.mxu0
  %v341 = vadd.f32 %v44, %v340
  %342 = vdwg.mxu0
  %v343 = vsel %vm150, %v338, -inf
  %344 = vmax.xlane.f32.xlu0 %v343
  %v345 = vpop.xlane.xlu0 %344
  %v346 = vsel %vm150, %v341, -inf
  %347 = vmax.xlane.f32.xlu0 %v346
  %v348 = vpop.xlane.xlu0 %347
  %v349 = vsub.f32 %v338, %v345
  %v350 = vsub.f32 %v341, %v348
  %v351 = vmul.f32 %v349, 1.442695
  %v352 = vpow.pop %v351
  %v353 = vmul.f32 %v350, 1.442695
  %v354 = vpow.pop %v353
  %v355 = vsel %vm150, %v352, 0.0
  %356 = vadd.xlane.f32.xlu0 %v355
  %v357 = vpop.xlane.xlu0 %356
  %v358 = vsel %vm150, %v354, 0.0
  %359 = vadd.xlane.f32.xlu0 %v358
  %v360 = vpop.xlane.xlu0 %359
  %v361 = vrcp.pop %v357
  %v362 = vrcp.pop %v360
  %v363 = vmul.f32 %v352, %v361
  %v364 = vmul.f32 %v354, %v362
  %v366 = vsel %vm150, %v363, 0
  %v369 = vsel %vm150, %v364, 0
  %371 = vmatpush.msra.mxu0 0.0
  %372 = vmatpush.msra.mxu0 0.0
  %373 = vmatpush.msra.mxu0 0.0
  %374 = vmatpush.msra.mxu0 0.0
  %375 = vmatpush.msra.mxu0 0.0
  %376 = vmatpush.msra.mxu0 0.0
  %377 = vmatpush.msra.mxu0 0.0
  %378 = vmatpush.msra.mxu0 0.0
  %379 = vmatpush.msra.mxu0 0.0
  %380 = vmatpush.msra.mxu0 0.0
  %381 = vmatpush.msra.mxu0 0.0
  %382 = vmatpush.msra.mxu0 0.0
  %383 = vmatpush.msra.mxu0 0.0
  %384 = vmatpush.msra.mxu0 0.0
  %385 = vmatpush.msra.mxu0 %v110
  %386 = vmatpush.msra.mxu0 %v107
  %387 = vmatmul.f32.gmra.mxu0 %v366
  %v388 = vpop.f32.mrf.mxu0
  %v389 = vadd.f32 0.0, %v388
  %390 = vmatmul.f32.gmra.mxu0 %v369
  %v391 = vpop.f32.mrf.mxu0
  %v392 = vadd.f32 0.0, %v391
  %393 = vdwg.mxu0
  %v394 = vadd.f32 %v299, %v389
  %v395 = vadd.f32 %v302, %v392
  %396 = vrot.lane.b32.xlu0 %v84, 104
  %v397 = vpop.permute.xlu0 %396
  %398 = vrot.lane.b32.xlu0 %v87, 104
  %v399 = vpop.permute.xlu0 %398
  %400 = vrot.lane.b32.xlu0 %v84, 72
  %v401 = vpop.permute.xlu0 %400
  %402 = vrot.lane.b32.xlu0 %v87, 72
  %v403 = vpop.permute.xlu0 %402
  %v404 = vsel %vm118, %v397, 0
  %v406 = vsel %vm118, %v399, 0
  %v408 = vsel %vm118, %v401, 0
  %v410 = vsel %vm118, %v403, 0
  %412 = vmatpush.xpose.msra.mxu0 0.0
  %413 = vmatpush.xpose.msra.mxu0 0.0
  %414 = vmatpush.xpose.msra.mxu0 0.0
  %415 = vmatpush.xpose.msra.mxu0 0.0
  %416 = vmatpush.xpose.msra.mxu0 0.0
  %417 = vmatpush.xpose.msra.mxu0 0.0
  %418 = vmatpush.xpose.msra.mxu0 0.0
  %419 = vmatpush.xpose.msra.mxu0 0.0
  %420 = vmatpush.xpose.msra.mxu0 0.0
  %421 = vmatpush.xpose.msra.mxu0 0.0
  %422 = vmatpush.xpose.msra.mxu0 0.0
  %423 = vmatpush.xpose.msra.mxu0 0.0
  %424 = vmatpush.xpose.msra.mxu0 0.0
  %425 = vmatpush.xpose.msra.mxu0 0.0
  %426 = vmatpush.xpose.msra.mxu0 %v410
  %427 = vmatpush.xpose.msra.mxu0 %v408
  %428 = vmatmul.f32.gmra.mxu0 %v404
  %v429 = vpop.f32.mrf.mxu0
  %v430 = vadd.f32 %v43, %v429
  %431 = vmatmul.f32.gmra.mxu0 %v406
  %v432 = vpop.f32.mrf.mxu0
  %v433 = vadd.f32 %v44, %v432
  %434 = vdwg.mxu0
  %v435 = vsel %vm150, %v430, -inf
  %436 = vmax.xlane.f32.xlu0 %v435
  %v437 = vpop.xlane.xlu0 %436
  %v438 = vsel %vm150, %v433, -inf
  %439 = vmax.xlane.f32.xlu0 %v438
  %v440 = vpop.xlane.xlu0 %439
  %v441 = vsub.f32 %v430, %v437
  %v442 = vsub.f32 %v433, %v440
  %v443 = vmul.f32 %v441, 1.442695
  %v444 = vpow.pop %v443
  %v445 = vmul.f32 %v442, 1.442695
  %v446 = vpow.pop %v445
  %v447 = vsel %vm150, %v444, 0.0
  %448 = vadd.xlane.f32.xlu0 %v447
  %v449 = vpop.xlane.xlu0 %448
  %v450 = vsel %vm150, %v446, 0.0
  %451 = vadd.xlane.f32.xlu0 %v450
  %v452 = vpop.xlane.xlu0 %451
  %v453 = vrcp.pop %v449
  %v454 = vrcp.pop %v452
  %v455 = vmul.f32 %v444, %v453
  %v456 = vmul.f32 %v446, %v454
  %459 = vrot.lane.b32.xlu0 %v107, 96
  %v460 = vpop.permute.xlu0 %459
  %461 = vrot.lane.b32.xlu0 %v110, 96
  %v462 = vpop.permute.xlu0 %461
  %v466 = vsel %vm150, %v455, 0
  %v469 = vsel %vm150, %v456, 0
  %471 = vmatpush.msra.mxu0 0.0
  %472 = vmatpush.msra.mxu0 0.0
  %473 = vmatpush.msra.mxu0 0.0
  %474 = vmatpush.msra.mxu0 0.0
  %475 = vmatpush.msra.mxu0 0.0
  %476 = vmatpush.msra.mxu0 0.0
  %477 = vmatpush.msra.mxu0 0.0
  %478 = vmatpush.msra.mxu0 0.0
  %479 = vmatpush.msra.mxu0 0.0
  %480 = vmatpush.msra.mxu0 0.0
  %481 = vmatpush.msra.mxu0 0.0
  %482 = vmatpush.msra.mxu0 0.0
  %483 = vmatpush.msra.mxu0 0.0
  %484 = vmatpush.msra.mxu0 0.0
  %485 = vmatpush.msra.mxu0 %v462
  %486 = vmatpush.msra.mxu0 %v460
  %487 = vmatmul.f32.gmra.mxu0 %v466
  %v488 = vpop.f32.mrf.mxu0
  %v489 = vadd.f32 0.0, %v488
  %490 = vmatmul.f32.gmra.mxu0 %v469
  %v491 = vpop.f32.mrf.mxu0
  %v492 = vadd.f32 0.0, %v491
  %493 = vdwg.mxu0
  %v494 = vadd.f32 %v394, %v489
  %v495 = vadd.f32 %v395, %v492
  %v496 = vld [vmem:[%s8] sm:$0x1]
  %v497 = vperm.slane %v496, 0
  %v498 = vadd.f32 %v494, %v497
  %v499 = vadd.f32 %v495, %v497
  %v500 = vadd.f32 %v41, %v498
  %v501 = vadd.f32 %v42, %v499
  %v502 = vld [vmem:[%s8 + $0x1] sm:$0x1]
  %v503 = vld [vmem:[%s8 + $0x2] sm:$0x1]
  %v504 = vsel %vm59, %v500, 0.0
  %505 = vadd.xlane.f32.xlu0 %v504
  %v506 = vpop.xlane.xlu0 %505
  %v507 = vsel %vm59, %v501, 0.0
  %508 = vadd.xlane.f32.xlu0 %v507
  %v509 = vpop.xlane.xlu0 %508
  %v510 = vrcp.pop 32.0
  %v511 = vmul.f32 32.0, %v510
  %v512 = vsub.f32 1.0, %v511
  %v513 = vmul.f32 %v510, %v512
  %v514 = vadd.f32 %v510, %v513
  %vm515 = vweird.f32 %v510
  %v516 = vsel %vm515, %v510, %v514
  %v517 = vmul.f32 %v506, %v516
  %v518 = vmul.f32 %v509, %v516
  %v519 = vsub.f32 %v500, %v517
  %v520 = vsub.f32 %v501, %v518
  %v521 = vmul.f32 %v519, %v519
  %v522 = vmul.f32 %v520, %v520
  %v523 = vsel %vm59, %v521, 0.0
  %524 = vadd.xlane.f32.xlu0 %v523
  %v525 = vpop.xlane.xlu0 %524
  %v526 = vsel %vm59, %v522, 0.0
  %527 = vadd.xlane.f32.xlu0 %v526
  %v528 = vpop.xlane.xlu0 %527
  %v529 = vmul.f32 %v525, %v516
  %v530 = vmul.f32 %v528, %v516
  %v531 = vadd.f32 %v529, 1e-05
  %v532 = vadd.f32 %v530, 1e-05
  %v533 = vrsqrt.pop %v531
  %v534 = vmul.f32 %v533, %v531
  %v535 = vmul.f32 %v534, %v533
  %v536 = vmul.f32 0.5, %v535
  %v537 = vsub.f32 1.5, %v536
  %v538 = vmul.f32 %v533, %v537
  %vm539 = vweird.f32 %v531
  %vm540 = vweird.f32 %v533
  %vm541 = vmor %vm539, %vm540
  %v542 = vsel %vm541, %v533, %v538
  %v543 = vrsqrt.pop %v532
  %v544 = vmul.f32 %v543, %v532
  %v545 = vmul.f32 %v544, %v543
  %v546 = vmul.f32 0.5, %v545
  %v547 = vsub.f32 1.5, %v546
  %v548 = vmul.f32 %v543, %v547
  %vm549 = vweird.f32 %v532
  %vm550 = vweird.f32 %v543
  %vm551 = vmor %vm549, %vm550
  %v552 = vsel %vm551, %v543, %v548
  %v553 = vmul.f32 %v519, %v542
  %v554 = vmul.f32 %v520, %v552
  %v555 = vperm.slane %v502, 0
  %v556 = vmul.f32 %v553, %v555
  %v557 = vmul.f32 %v554, %v555
  %v558 = vperm.slane %v503, 0
  %v559 = vadd.f32 %v556, %v558
  %v560 = vadd.f32 %v557, %v558
  %v561 = vld [vmem:[%s5] sm:$0xff]
  %v562 = vld [vmem:[%s5 + $0x8] sm:$0xff]
  %v563 = vld [vmem:[%s5 + $0x10] sm:$0xff]
  %v564 = vld [vmem:[%s5 + $0x18] sm:$0xff]
  %v565 = vld [vmem:[%s6] sm:$0x1]
  %v567 = vperm.slane %v565, 0
  %v570 = vsel %vm59, %v559, 0
  %v573 = vsel %vm59, %v560, 0
  %575 = vmatpush.msra.mxu0 0.0
  %576 = vmatpush.msra.mxu0 0.0
  %577 = vmatpush.msra.mxu0 0.0
  %578 = vmatpush.msra.mxu0 0.0
  %579 = vmatpush.msra.mxu0 0.0
  %580 = vmatpush.msra.mxu0 0.0
  %581 = vmatpush.msra.mxu0 0.0
  %582 = vmatpush.msra.mxu0 0.0
  %583 = vmatpush.msra.mxu0 0.0
  %584 = vmatpush.msra.mxu0 0.0
  %585 = vmatpush.msra.mxu0 0.0
  %586 = vmatpush.msra.mxu0 0.0
  %587 = vmatpush.msra.mxu0 %v564
  %588 = vmatpush.msra.mxu0 %v563
  %589 = vmatpush.msra.mxu0 %v562
  %590 = vmatpush.msra.mxu0 %v561
  %591 = vmatmul.f32.gmra.mxu0 %v570
  %v592 = vpop.f32.mrf.mxu0
  %v593 = vadd.f32 %v567, %v592
  %594 = vmatmul.f32.gmra.mxu0 %v573
  %v595 = vpop.f32.mrf.mxu0
  %v596 = vadd.f32 %v567, %v595
  %597 = vdwg.mxu0
  %v598 = vmax.f32 %v593, 0.0
  %v599 = vmax.f32 %v596, 0.0
  %v600 = vld [vmem:[%s7] sm:$0xff]
  %v601 = vld [vmem:[%s7 + $0x8] sm:$0xff]
  %v602 = vld [vmem:[%s7 + $0x10] sm:$0xff]
  %v603 = vld [vmem:[%s7 + $0x18] sm:$0xff]
  %v604 = vld [vmem:[%s7 + $0x20] sm:$0xff]
  %v605 = vld [vmem:[%s7 + $0x28] sm:$0xff]
  %v606 = vld [vmem:[%s7 + $0x30] sm:$0xff]
  %v607 = vld [vmem:[%s7 + $0x38] sm:$0xff]
  %v608 = vld [vmem:[%s8 + $0x3] sm:$0x1]
  %v609 = vperm.slane %v608, 0
  %vm610 = vcmask 523264
  %v612 = vsel %vm610, %v598, 0
  %v615 = vsel %vm610, %v599, 0
  %617 = vmatpush.msra.mxu0 0.0
  %618 = vmatpush.msra.mxu0 0.0
  %619 = vmatpush.msra.mxu0 0.0
  %620 = vmatpush.msra.mxu0 0.0
  %621 = vmatpush.msra.mxu0 0.0
  %622 = vmatpush.msra.mxu0 0.0
  %623 = vmatpush.msra.mxu0 0.0
  %624 = vmatpush.msra.mxu0 0.0
  %625 = vmatpush.msra.mxu0 %v607
  %626 = vmatpush.msra.mxu0 %v606
  %627 = vmatpush.msra.mxu0 %v605
  %628 = vmatpush.msra.mxu0 %v604
  %629 = vmatpush.msra.mxu0 %v603
  %630 = vmatpush.msra.mxu0 %v602
  %631 = vmatpush.msra.mxu0 %v601
  %632 = vmatpush.msra.mxu0 %v600
  %633 = vmatmul.f32.gmra.mxu0 %v612
  %v634 = vpop.f32.mrf.mxu0
  %v635 = vadd.f32 %v609, %v634
  %636 = vmatmul.f32.gmra.mxu0 %v615
  %v637 = vpop.f32.mrf.mxu0
  %v638 = vadd.f32 %v609, %v637
  %639 = vdwg.mxu0
  %v640 = vadd.f32 %v559, %v635
  %v641 = vadd.f32 %v560, %v638
  %v642 = vld [vmem:[%s8 + $0x4] sm:$0x1]
  %v643 = vld [vmem:[%s8 + $0x5] sm:$0x1]
  %v644 = vsel %vm59, %v640, 0.0
  %645 = vadd.xlane.f32.xlu0 %v644
  %v646 = vpop.xlane.xlu0 %645
  %v647 = vsel %vm59, %v641, 0.0
  %648 = vadd.xlane.f32.xlu0 %v647
  %v649 = vpop.xlane.xlu0 %648
  %v650 = vmul.f32 %v646, %v516
  %v651 = vmul.f32 %v649, %v516
  %v652 = vsub.f32 %v640, %v650
  %v653 = vsub.f32 %v641, %v651
  %v654 = vmul.f32 %v652, %v652
  %v655 = vmul.f32 %v653, %v653
  %v656 = vsel %vm59, %v654, 0.0
  %657 = vadd.xlane.f32.xlu0 %v656
  %v658 = vpop.xlane.xlu0 %657
  %v659 = vsel %vm59, %v655, 0.0
  %660 = vadd.xlane.f32.xlu0 %v659
  %v661 = vpop.xlane.xlu0 %660
  %v662 = vmul.f32 %v658, %v516
  %v663 = vmul.f32 %v661, %v516
  %v664 = vadd.f32 %v662, 1e-05
  %v665 = vadd.f32 %v663, 1e-05
  %v666 = vrsqrt.pop %v664
  %v667 = vmul.f32 %v666, %v664
  %v668 = vmul.f32 %v667, %v666
  %v669 = vmul.f32 0.5, %v668
  %v670 = vsub.f32 1.5, %v669
  %v671 = vmul.f32 %v666, %v670
  %vm672 = vweird.f32 %v664
  %vm673 = vweird.f32 %v666
  %vm674 = vmor %vm672, %vm673
  %v675 = vsel %vm674, %v666, %v671
  %v676 = vrsqrt.pop %v665
  %v677 = vmul.f32 %v676, %v665
  %v678 = vmul.f32 %v677, %v676
  %v679 = vmul.f32 0.5, %v678
  %v680 = vsub.f32 1.5, %v679
  %v681 = vmul.f32 %v676, %v680
  %vm682 = vweird.f32 %v665
  %vm683 = vweird.f32 %v676
  %vm684 = vmor %vm682, %vm683
  %v685 = vsel %vm684, %v676, %v681
  %v686 = vmul.f32 %v652, %v675
  %v687 = vmul.f32 %v653, %v685
  %v688 = vperm.slane %v642, 0
  %v689 = vmul.f32 %v686, %v688
  %v690 = vmul.f32 %v687, %v688
  %v691 = vperm.slane %v643, 0
  %v692 = vadd.f32 %v689, %v691
  %v693 = vadd.f32 %v690, %v691
  %s694 = scalar_lea.vmem %s3, 64
  %v695 = vld [vmem:[%s694] sm:$0xff]
  %v696 = vld [vmem:[%s694 + $0x8] sm:$0xff]
  %v697 = vld [vmem:[%s694 + $0x10] sm:$0xff]
  %v698 = vld [vmem:[%s694 + $0x18] sm:$0xff]
  %v699 = vld [vmem:[%s694 + $0x20] sm:$0xff]
  %v700 = vld [vmem:[%s694 + $0x28] sm:$0xff]
  %v701 = vld [vmem:[%s694 + $0x30] sm:$0xff]
  %v702 = vld [vmem:[%s694 + $0x38] sm:$0xff]
  %s703 = scalar_lea.vmem %s4, 2
  %v704 = vld [vmem:[%s703] sm:$0x3]
  %v706 = vperm.slane %v704, 0
  %v707 = vperm.slane %v704, 1
  %v711 = vsel %vm59, %v692, 0
  %v714 = vsel %vm59, %v693, 0
  %716 = vmatpush.msra.mxu0 0.0
  %717 = vmatpush.msra.mxu0 0.0
  %718 = vmatpush.msra.mxu0 0.0
  %719 = vmatpush.msra.mxu0 0.0
  %720 = vmatpush.msra.mxu0 0.0
  %721 = vmatpush.msra.mxu0 0.0
  %722 = vmatpush.msra.mxu0 0.0
  %723 = vmatpush.msra.mxu0 0.0
  %724 = vmatpush.msra.mxu0 0.0
  %725 = vmatpush.msra.mxu0 0.0
  %726 = vmatpush.msra.mxu0 0.0
  %727 = vmatpush.msra.mxu0 0.0
  %728 = vmatpush.msra.mxu0 %v701
  %729 = vmatpush.msra.mxu0 %v699
  %730 = vmatpush.msra.mxu0 %v697
  %731 = vmatpush.msra.mxu0 %v695
  %732 = vmatmul.f32.gmra.mxu0 %v711
  %v733 = vpop.f32.mrf.mxu0
  %v734 = vadd.f32 %v706, %v733
  %735 = vmatmul.f32.gmra.mxu0 %v714
  %v736 = vpop.f32.mrf.mxu0
  %v737 = vadd.f32 %v706, %v736
  %738 = vdwg.mxu0
  %739 = vmatpush.msra.mxu0 0.0
  %740 = vmatpush.msra.mxu0 0.0
  %741 = vmatpush.msra.mxu0 0.0
  %742 = vmatpush.msra.mxu0 0.0
  %743 = vmatpush.msra.mxu0 0.0
  %744 = vmatpush.msra.mxu0 0.0
  %745 = vmatpush.msra.mxu0 0.0
  %746 = vmatpush.msra.mxu0 0.0
  %747 = vmatpush.msra.mxu0 0.0
  %748 = vmatpush.msra.mxu0 0.0
  %749 = vmatpush.msra.mxu0 0.0
  %750 = vmatpush.msra.mxu0 0.0
  %751 = vmatpush.msra.mxu0 %v702
  %752 = vmatpush.msra.mxu0 %v700
  %753 = vmatpush.msra.mxu0 %v698
  %754 = vmatpush.msra.mxu0 %v696
  %755 = vmatmul.f32.gmra.mxu0 %v711
  %v756 = vpop.f32.mrf.mxu0
  %v757 = vadd.f32 %v707, %v756
  %758 = vmatmul.f32.gmra.mxu0 %v714
  %v759 = vpop.f32.mrf.mxu0
  %v760 = vadd.f32 %v707, %v759
  %761 = vdwg.mxu0
  %764 = vrot.lane.b32.xlu0 %v734, 96
  %v765 = vpop.permute.xlu0 %764
  %766 = vrot.lane.b32.xlu0 %v737, 96
  %v767 = vpop.permute.xlu0 %766
  %v768 = vsel %vm118, %v734, 0
  %v770 = vsel %vm118, %v737, 0
  %v772 = vsel %vm118, %v765, 0
  %v774 = vsel %vm118, %v767, 0
  %776 = vmatpush.xpose.msra.mxu0 0.0
  %777 = vmatpush.xpose.msra.mxu0 0.0
  %778 = vmatpush.xpose.msra.mxu0 0.0
  %779 = vmatpush.xpose.msra.mxu0 0.0
  %780 = vmatpush.xpose.msra.mxu0 0.0
  %781 = vmatpush.xpose.msra.mxu0 0.0
  %782 = vmatpush.xpose.msra.mxu0 0.0
  %783 = vmatpush.xpose.msra.mxu0 0.0
  %784 = vmatpush.xpose.msra.mxu0 0.0
  %785 = vmatpush.xpose.msra.mxu0 0.0
  %786 = vmatpush.xpose.msra.mxu0 0.0
  %787 = vmatpush.xpose.msra.mxu0 0.0
  %788 = vmatpush.xpose.msra.mxu0 0.0
  %789 = vmatpush.xpose.msra.mxu0 0.0
  %790 = vmatpush.xpose.msra.mxu0 %v774
  %791 = vmatpush.xpose.msra.mxu0 %v772
  %792 = vmatmul.f32.gmra.mxu0 %v768
  %v793 = vpop.f32.mrf.mxu0
  %v794 = vadd.f32 %v43, %v793
  %795 = vmatmul.f32.gmra.mxu0 %v770
  %v796 = vpop.f32.mrf.mxu0
  %v797 = vadd.f32 %v44, %v796
  %798 = vdwg.mxu0
  %v799 = vsel %vm150, %v794, -inf
  %800 = vmax.xlane.f32.xlu0 %v799
  %v801 = vpop.xlane.xlu0 %800
  %v802 = vsel %vm150, %v797, -inf
  %803 = vmax.xlane.f32.xlu0 %v802
  %v804 = vpop.xlane.xlu0 %803
  %v805 = vsub.f32 %v794, %v801
  %v806 = vsub.f32 %v797, %v804
  %v807 = vmul.f32 %v805, 1.442695
  %v808 = vpow.pop %v807
  %v809 = vmul.f32 %v806, 1.442695
  %v810 = vpow.pop %v809
  %v811 = vsel %vm150, %v808, 0.0
  %812 = vadd.xlane.f32.xlu0 %v811
  %v813 = vpop.xlane.xlu0 %812
  %v814 = vsel %vm150, %v810, 0.0
  %815 = vadd.xlane.f32.xlu0 %v814
  %v816 = vpop.xlane.xlu0 %815
  %v817 = vrcp.pop %v813
  %v818 = vrcp.pop %v816
  %v819 = vmul.f32 %v808, %v817
  %v820 = vmul.f32 %v810, %v818
  %821 = vrot.lane.b32.xlu0 %v734, 120
  %v822 = vpop.permute.xlu0 %821
  %823 = vrot.lane.b32.xlu0 %v737, 120
  %v824 = vpop.permute.xlu0 %823
  %825 = vrot.lane.b32.xlu0 %v734, 88
  %v826 = vpop.permute.xlu0 %825
  %827 = vrot.lane.b32.xlu0 %v737, 88
  %v828 = vpop.permute.xlu0 %827
  %v829 = vsel %vm118, %v822, 0
  %v831 = vsel %vm118, %v824, 0
  %v833 = vsel %vm118, %v826, 0
  %v835 = vsel %vm118, %v828, 0
  %837 = vmatpush.xpose.msra.mxu0 0.0
  %838 = vmatpush.xpose.msra.mxu0 0.0
  %839 = vmatpush.xpose.msra.mxu0 0.0
  %840 = vmatpush.xpose.msra.mxu0 0.0
  %841 = vmatpush.xpose.msra.mxu0 0.0
  %842 = vmatpush.xpose.msra.mxu0 0.0
  %843 = vmatpush.xpose.msra.mxu0 0.0
  %844 = vmatpush.xpose.msra.mxu0 0.0
  %845 = vmatpush.xpose.msra.mxu0 0.0
  %846 = vmatpush.xpose.msra.mxu0 0.0
  %847 = vmatpush.xpose.msra.mxu0 0.0
  %848 = vmatpush.xpose.msra.mxu0 0.0
  %849 = vmatpush.xpose.msra.mxu0 0.0
  %850 = vmatpush.xpose.msra.mxu0 0.0
  %851 = vmatpush.xpose.msra.mxu0 %v835
  %852 = vmatpush.xpose.msra.mxu0 %v833
  %853 = vmatmul.f32.gmra.mxu0 %v829
  %v854 = vpop.f32.mrf.mxu0
  %v855 = vadd.f32 %v43, %v854
  %856 = vmatmul.f32.gmra.mxu0 %v831
  %v857 = vpop.f32.mrf.mxu0
  %v858 = vadd.f32 %v44, %v857
  %859 = vdwg.mxu0
  %v860 = vsel %vm150, %v855, -inf
  %861 = vmax.xlane.f32.xlu0 %v860
  %v862 = vpop.xlane.xlu0 %861
  %v863 = vsel %vm150, %v858, -inf
  %864 = vmax.xlane.f32.xlu0 %v863
  %v865 = vpop.xlane.xlu0 %864
  %v866 = vsub.f32 %v855, %v862
  %v867 = vsub.f32 %v858, %v865
  %v868 = vmul.f32 %v866, 1.442695
  %v869 = vpow.pop %v868
  %v870 = vmul.f32 %v867, 1.442695
  %v871 = vpow.pop %v870
  %v872 = vsel %vm150, %v869, 0.0
  %873 = vadd.xlane.f32.xlu0 %v872
  %v874 = vpop.xlane.xlu0 %873
  %v875 = vsel %vm150, %v871, 0.0
  %876 = vadd.xlane.f32.xlu0 %v875
  %v877 = vpop.xlane.xlu0 %876
  %v878 = vrcp.pop %v874
  %v879 = vrcp.pop %v877
  %v880 = vmul.f32 %v869, %v878
  %v881 = vmul.f32 %v871, %v879
  %882 = vrot.lane.b32.xlu0 %v734, 32
  %v883 = vpop.permute.xlu0 %882
  %884 = vrot.lane.b32.xlu0 %v737, 32
  %v885 = vpop.permute.xlu0 %884
  %v889 = vsel %vm150, %v880, 0
  %v892 = vsel %vm150, %v881, 0
  %894 = vmatpush.msra.mxu0 0.0
  %895 = vmatpush.msra.mxu0 0.0
  %896 = vmatpush.msra.mxu0 0.0
  %897 = vmatpush.msra.mxu0 0.0
  %898 = vmatpush.msra.mxu0 0.0
  %899 = vmatpush.msra.mxu0 0.0
  %900 = vmatpush.msra.mxu0 0.0
  %901 = vmatpush.msra.mxu0 0.0
  %902 = vmatpush.msra.mxu0 0.0
  %903 = vmatpush.msra.mxu0 0.0
  %904 = vmatpush.msra.mxu0 0.0
  %905 = vmatpush.msra.mxu0 0.0
  %906 = vmatpush.msra.mxu0 0.0
  %907 = vmatpush.msra.mxu0 0.0
  %908 = vmatpush.msra.mxu0 %v885
  %909 = vmatpush.msra.mxu0 %v883
  %910 = vmatmul.f32.gmra.mxu0 %v889
  %v911 = vpop.f32.mrf.mxu0
  %v912 = vadd.f32 0.0, %v911
  %913 = vmatmul.f32.gmra.mxu0 %v892
  %v914 = vpop.f32.mrf.mxu0
  %v915 = vadd.f32 0.0, %v914
  %916 = vdwg.mxu0
  %917 = vrot.lane.b32.xlu0 %v734, 64
  %v918 = vpop.permute.xlu0 %917
  %919 = vrot.lane.b32.xlu0 %v737, 64
  %v920 = vpop.permute.xlu0 %919
  %v924 = vsel %vm150, %v819, 0
  %v927 = vsel %vm150, %v820, 0
  %929 = vmatpush.msra.mxu0 0.0
  %930 = vmatpush.msra.mxu0 0.0
  %931 = vmatpush.msra.mxu0 0.0
  %932 = vmatpush.msra.mxu0 0.0
  %933 = vmatpush.msra.mxu0 0.0
  %934 = vmatpush.msra.mxu0 0.0
  %935 = vmatpush.msra.mxu0 0.0
  %936 = vmatpush.msra.mxu0 0.0
  %937 = vmatpush.msra.mxu0 0.0
  %938 = vmatpush.msra.mxu0 0.0
  %939 = vmatpush.msra.mxu0 0.0
  %940 = vmatpush.msra.mxu0 0.0
  %941 = vmatpush.msra.mxu0 0.0
  %942 = vmatpush.msra.mxu0 0.0
  %943 = vmatpush.msra.mxu0 %v920
  %944 = vmatpush.msra.mxu0 %v918
  %945 = vmatmul.f32.gmra.mxu0 %v924
  %v946 = vpop.f32.mrf.mxu0
  %v947 = vadd.f32 %v912, %v946
  %948 = vmatmul.f32.gmra.mxu0 %v927
  %v949 = vpop.f32.mrf.mxu0
  %v950 = vadd.f32 %v915, %v949
  %951 = vdwg.mxu0
  %952 = vrot.lane.b32.xlu0 %v734, 112
  %v953 = vpop.permute.xlu0 %952
  %954 = vrot.lane.b32.xlu0 %v737, 112
  %v955 = vpop.permute.xlu0 %954
  %956 = vrot.lane.b32.xlu0 %v734, 80
  %v957 = vpop.permute.xlu0 %956
  %958 = vrot.lane.b32.xlu0 %v737, 80
  %v959 = vpop.permute.xlu0 %958
  %v960 = vsel %vm118, %v953, 0
  %v962 = vsel %vm118, %v955, 0
  %v964 = vsel %vm118, %v957, 0
  %v966 = vsel %vm118, %v959, 0
  %968 = vmatpush.xpose.msra.mxu0 0.0
  %969 = vmatpush.xpose.msra.mxu0 0.0
  %970 = vmatpush.xpose.msra.mxu0 0.0
  %971 = vmatpush.xpose.msra.mxu0 0.0
  %972 = vmatpush.xpose.msra.mxu0 0.0
  %973 = vmatpush.xpose.msra.mxu0 0.0
  %974 = vmatpush.xpose.msra.mxu0 0.0
  %975 = vmatpush.xpose.msra.mxu0 0.0
  %976 = vmatpush.xpose.msra.mxu0 0.0
  %977 = vmatpush.xpose.msra.mxu0 0.0
  %978 = vmatpush.xpose.msra.mxu0 0.0
  %979 = vmatpush.xpose.msra.mxu0 0.0
  %980 = vmatpush.xpose.msra.mxu0 0.0
  %981 = vmatpush.xpose.msra.mxu0 0.0
  %982 = vmatpush.xpose.msra.mxu0 %v966
  %983 = vmatpush.xpose.msra.mxu0 %v964
  %984 = vmatmul.f32.gmra.mxu0 %v960
  %v985 = vpop.f32.mrf.mxu0
  %v986 = vadd.f32 %v43, %v985
  %987 = vmatmul.f32.gmra.mxu0 %v962
  %v988 = vpop.f32.mrf.mxu0
  %v989 = vadd.f32 %v44, %v988
  %990 = vdwg.mxu0
  %v991 = vsel %vm150, %v986, -inf
  %992 = vmax.xlane.f32.xlu0 %v991
  %v993 = vpop.xlane.xlu0 %992
  %v994 = vsel %vm150, %v989, -inf
  %995 = vmax.xlane.f32.xlu0 %v994
  %v996 = vpop.xlane.xlu0 %995
  %v997 = vsub.f32 %v986, %v993
  %v998 = vsub.f32 %v989, %v996
  %v999 = vmul.f32 %v997, 1.442695
  %v1000 = vpow.pop %v999
  %v1001 = vmul.f32 %v998, 1.442695
  %v1002 = vpow.pop %v1001
  %v1003 = vsel %vm150, %v1000, 0.0
  %1004 = vadd.xlane.f32.xlu0 %v1003
  %v1005 = vpop.xlane.xlu0 %1004
  %v1006 = vsel %vm150, %v1002, 0.0
  %1007 = vadd.xlane.f32.xlu0 %v1006
  %v1008 = vpop.xlane.xlu0 %1007
  %v1009 = vrcp.pop %v1005
  %v1010 = vrcp.pop %v1008
  %v1011 = vmul.f32 %v1000, %v1009
  %v1012 = vmul.f32 %v1002, %v1010
  %v1014 = vsel %vm150, %v1011, 0
  %v1017 = vsel %vm150, %v1012, 0
  %1019 = vmatpush.msra.mxu0 0.0
  %1020 = vmatpush.msra.mxu0 0.0
  %1021 = vmatpush.msra.mxu0 0.0
  %1022 = vmatpush.msra.mxu0 0.0
  %1023 = vmatpush.msra.mxu0 0.0
  %1024 = vmatpush.msra.mxu0 0.0
  %1025 = vmatpush.msra.mxu0 0.0
  %1026 = vmatpush.msra.mxu0 0.0
  %1027 = vmatpush.msra.mxu0 0.0
  %1028 = vmatpush.msra.mxu0 0.0
  %1029 = vmatpush.msra.mxu0 0.0
  %1030 = vmatpush.msra.mxu0 0.0
  %1031 = vmatpush.msra.mxu0 0.0
  %1032 = vmatpush.msra.mxu0 0.0
  %1033 = vmatpush.msra.mxu0 %v760
  %1034 = vmatpush.msra.mxu0 %v757
  %1035 = vmatmul.f32.gmra.mxu0 %v1014
  %v1036 = vpop.f32.mrf.mxu0
  %v1037 = vadd.f32 0.0, %v1036
  %1038 = vmatmul.f32.gmra.mxu0 %v1017
  %v1039 = vpop.f32.mrf.mxu0
  %v1040 = vadd.f32 0.0, %v1039
  %1041 = vdwg.mxu0
  %v1042 = vadd.f32 %v947, %v1037
  %v1043 = vadd.f32 %v950, %v1040
  %1044 = vrot.lane.b32.xlu0 %v734, 104
  %v1045 = vpop.permute.xlu0 %1044
  %1046 = vrot.lane.b32.xlu0 %v737, 104
  %v1047 = vpop.permute.xlu0 %1046
  %1048 = vrot.lane.b32.xlu0 %v734, 72
  %v1049 = vpop.permute.xlu0 %1048
  %1050 = vrot.lane.b32.xlu0 %v737, 72
  %v1051 = vpop.permute.xlu0 %1050
  %v1052 = vsel %vm118, %v1045, 0
  %v1054 = vsel %vm118, %v1047, 0
  %v1056 = vsel %vm118, %v1049, 0
  %v1058 = vsel %vm118, %v1051, 0
  %1060 = vmatpush.xpose.msra.mxu0 0.0
  %1061 = vmatpush.xpose.msra.mxu0 0.0
  %1062 = vmatpush.xpose.msra.mxu0 0.0
  %1063 = vmatpush.xpose.msra.mxu0 0.0
  %1064 = vmatpush.xpose.msra.mxu0 0.0
  %1065 = vmatpush.xpose.msra.mxu0 0.0
  %1066 = vmatpush.xpose.msra.mxu0 0.0
  %1067 = vmatpush.xpose.msra.mxu0 0.0
  %1068 = vmatpush.xpose.msra.mxu0 0.0
  %1069 = vmatpush.xpose.msra.mxu0 0.0
  %1070 = vmatpush.xpose.msra.mxu0 0.0
  %1071 = vmatpush.xpose.msra.mxu0 0.0
  %1072 = vmatpush.xpose.msra.mxu0 0.0
  %1073 = vmatpush.xpose.msra.mxu0 0.0
  %1074 = vmatpush.xpose.msra.mxu0 %v1058
  %1075 = vmatpush.xpose.msra.mxu0 %v1056
  %1076 = vmatmul.f32.gmra.mxu0 %v1052
  %v1077 = vpop.f32.mrf.mxu0
  %v1078 = vadd.f32 %v43, %v1077
  %1079 = vmatmul.f32.gmra.mxu0 %v1054
  %v1080 = vpop.f32.mrf.mxu0
  %v1081 = vadd.f32 %v44, %v1080
  %1082 = vdwg.mxu0
  %v1083 = vsel %vm150, %v1078, -inf
  %1084 = vmax.xlane.f32.xlu0 %v1083
  %v1085 = vpop.xlane.xlu0 %1084
  %v1086 = vsel %vm150, %v1081, -inf
  %1087 = vmax.xlane.f32.xlu0 %v1086
  %v1088 = vpop.xlane.xlu0 %1087
  %v1089 = vsub.f32 %v1078, %v1085
  %v1090 = vsub.f32 %v1081, %v1088
  %v1091 = vmul.f32 %v1089, 1.442695
  %v1092 = vpow.pop %v1091
  %v1093 = vmul.f32 %v1090, 1.442695
  %v1094 = vpow.pop %v1093
  %v1095 = vsel %vm150, %v1092, 0.0
  %1096 = vadd.xlane.f32.xlu0 %v1095
  %v1097 = vpop.xlane.xlu0 %1096
  %v1098 = vsel %vm150, %v1094, 0.0
  %1099 = vadd.xlane.f32.xlu0 %v1098
  %v1100 = vpop.xlane.xlu0 %1099
  %v1101 = vrcp.pop %v1097
  %v1102 = vrcp.pop %v1100
  %v1103 = vmul.f32 %v1092, %v1101
  %v1104 = vmul.f32 %v1094, %v1102
  %1107 = vrot.lane.b32.xlu0 %v757, 96
  %v1108 = vpop.permute.xlu0 %1107
  %1109 = vrot.lane.b32.xlu0 %v760, 96
  %v1110 = vpop.permute.xlu0 %1109
  %v1114 = vsel %vm150, %v1103, 0
  %v1117 = vsel %vm150, %v1104, 0
  %1119 = vmatpush.msra.mxu0 0.0
  %1120 = vmatpush.msra.mxu0 0.0
  %1121 = vmatpush.msra.mxu0 0.0
  %1122 = vmatpush.msra.mxu0 0.0
  %1123 = vmatpush.msra.mxu0 0.0
  %1124 = vmatpush.msra.mxu0 0.0
  %1125 = vmatpush.msra.mxu0 0.0
  %1126 = vmatpush.msra.mxu0 0.0
  %1127 = vmatpush.msra.mxu0 0.0
  %1128 = vmatpush.msra.mxu0 0.0
  %1129 = vmatpush.msra.mxu0 0.0
  %1130 = vmatpush.msra.mxu0 0.0
  %1131 = vmatpush.msra.mxu0 0.0
  %1132 = vmatpush.msra.mxu0 0.0
  %1133 = vmatpush.msra.mxu0 %v1110
  %1134 = vmatpush.msra.mxu0 %v1108
  %1135 = vmatmul.f32.gmra.mxu0 %v1114
  %v1136 = vpop.f32.mrf.mxu0
  %v1137 = vadd.f32 0.0, %v1136
  %1138 = vmatmul.f32.gmra.mxu0 %v1117
  %v1139 = vpop.f32.mrf.mxu0
  %v1140 = vadd.f32 0.0, %v1139
  %1141 = vdwg.mxu0
  %v1142 = vadd.f32 %v1042, %v1137
  %v1143 = vadd.f32 %v1043, %v1140
  %v1144 = vld [vmem:[%s8 + $0x6] sm:$0x1]
  %v1145 = vperm.slane %v1144, 0
  %v1146 = vadd.f32 %v1142, %v1145
  %v1147 = vadd.f32 %v1143, %v1145
  %v1148 = vadd.f32 %v692, %v1146
  %v1149 = vadd.f32 %v693, %v1147
  %v1150 = vld [vmem:[%s8 + $0x7] sm:$0x1]
  %v1151 = vld [vmem:[%s8 + $0x8] sm:$0x1]
  %v1152 = vsel %vm59, %v1148, 0.0
  %1153 = vadd.xlane.f32.xlu0 %v1152
  %v1154 = vpop.xlane.xlu0 %1153
  %v1155 = vsel %vm59, %v1149, 0.0
  %1156 = vadd.xlane.f32.xlu0 %v1155
  %v1157 = vpop.xlane.xlu0 %1156
  %v1158 = vmul.f32 %v1154, %v516
  %v1159 = vmul.f32 %v1157, %v516
  %v1160 = vsub.f32 %v1148, %v1158
  %v1161 = vsub.f32 %v1149, %v1159
  %v1162 = vmul.f32 %v1160, %v1160
  %v1163 = vmul.f32 %v1161, %v1161
  %v1164 = vsel %vm59, %v1162, 0.0
  %1165 = vadd.xlane.f32.xlu0 %v1164
  %v1166 = vpop.xlane.xlu0 %1165
  %v1167 = vsel %vm59, %v1163, 0.0
  %1168 = vadd.xlane.f32.xlu0 %v1167
  %v1169 = vpop.xlane.xlu0 %1168
  %v1170 = vmul.f32 %v1166, %v516
  %v1171 = vmul.f32 %v1169, %v516
  %v1172 = vadd.f32 %v1170, 1e-05
  %v1173 = vadd.f32 %v1171, 1e-05
  %v1174 = vrsqrt.pop %v1172
  %v1175 = vmul.f32 %v1174, %v1172
  %v1176 = vmul.f32 %v1175, %v1174
  %v1177 = vmul.f32 0.5, %v1176
  %v1178 = vsub.f32 1.5, %v1177
  %v1179 = vmul.f32 %v1174, %v1178
  %vm1180 = vweird.f32 %v1172
  %vm1181 = vweird.f32 %v1174
  %vm1182 = vmor %vm1180, %vm1181
  %v1183 = vsel %vm1182, %v1174, %v1179
  %v1184 = vrsqrt.pop %v1173
  %v1185 = vmul.f32 %v1184, %v1173
  %v1186 = vmul.f32 %v1185, %v1184
  %v1187 = vmul.f32 0.5, %v1186
  %v1188 = vsub.f32 1.5, %v1187
  %v1189 = vmul.f32 %v1184, %v1188
  %vm1190 = vweird.f32 %v1173
  %vm1191 = vweird.f32 %v1184
  %vm1192 = vmor %vm1190, %vm1191
  %v1193 = vsel %vm1192, %v1184, %v1189
  %v1194 = vmul.f32 %v1160, %v1183
  %v1195 = vmul.f32 %v1161, %v1193
  %v1196 = vperm.slane %v1150, 0
  %v1197 = vmul.f32 %v1194, %v1196
  %v1198 = vmul.f32 %v1195, %v1196
  %v1199 = vperm.slane %v1151, 0
  %v1200 = vadd.f32 %v1197, %v1199
  %v1201 = vadd.f32 %v1198, %v1199
  %s1202 = scalar_lea.vmem %s5, 32
  %v1203 = vld [vmem:[%s1202] sm:$0xff]
  %v1204 = vld [vmem:[%s1202 + $0x8] sm:$0xff]
  %v1205 = vld [vmem:[%s1202 + $0x10] sm:$0xff]
  %v1206 = vld [vmem:[%s1202 + $0x18] sm:$0xff]
  %s1207 = scalar_lea.vmem %s6, 1
  %v1208 = vld [vmem:[%s1207] sm:$0x1]
  %v1210 = vperm.slane %v1208, 0
  %v1213 = vsel %vm59, %v1200, 0
  %v1216 = vsel %vm59, %v1201, 0
  %1218 = vmatpush.msra.mxu0 0.0
  %1219 = vmatpush.msra.mxu0 0.0
  %1220 = vmatpush.msra.mxu0 0.0
  %1221 = vmatpush.msra.mxu0 0.0
  %1222 = vmatpush.msra.mxu0 0.0
  %1223 = vmatpush.msra.mxu0 0.0
  %1224 = vmatpush.msra.mxu0 0.0
  %1225 = vmatpush.msra.mxu0 0.0
  %1226 = vmatpush.msra.mxu0 0.0
  %1227 = vmatpush.msra.mxu0 0.0
  %1228 = vmatpush.msra.mxu0 0.0
  %1229 = vmatpush.msra.mxu0 0.0
  %1230 = vmatpush.msra.mxu0 %v1206
  %1231 = vmatpush.msra.mxu0 %v1205
  %1232 = vmatpush.msra.mxu0 %v1204
  %1233 = vmatpush.msra.mxu0 %v1203
  %1234 = vmatmul.f32.gmra.mxu0 %v1213
  %v1235 = vpop.f32.mrf.mxu0
  %v1236 = vadd.f32 %v1210, %v1235
  %1237 = vmatmul.f32.gmra.mxu0 %v1216
  %v1238 = vpop.f32.mrf.mxu0
  %v1239 = vadd.f32 %v1210, %v1238
  %1240 = vdwg.mxu0
  %v1241 = vmax.f32 %v1236, 0.0
  %v1242 = vmax.f32 %v1239, 0.0
  %s1243 = scalar_lea.vmem %s7, 64
  %v1244 = vld [vmem:[%s1243] sm:$0xff]
  %v1245 = vld [vmem:[%s1243 + $0x8] sm:$0xff]
  %v1246 = vld [vmem:[%s1243 + $0x10] sm:$0xff]
  %v1247 = vld [vmem:[%s1243 + $0x18] sm:$0xff]
  %v1248 = vld [vmem:[%s1243 + $0x20] sm:$0xff]
  %v1249 = vld [vmem:[%s1243 + $0x28] sm:$0xff]
  %v1250 = vld [vmem:[%s1243 + $0x30] sm:$0xff]
  %v1251 = vld [vmem:[%s1243 + $0x38] sm:$0xff]
  %v1252 = vld [vmem:[%s8 + $0x9] sm:$0x1]
  %v1253 = vperm.slane %v1252, 0
  %v1255 = vsel %vm610, %v1241, 0
  %v1258 = vsel %vm610, %v1242, 0
  %1260 = vmatpush.msra.mxu0 0.0
  %1261 = vmatpush.msra.mxu0 0.0
  %1262 = vmatpush.msra.mxu0 0.0
  %1263 = vmatpush.msra.mxu0 0.0
  %1264 = vmatpush.msra.mxu0 0.0
  %1265 = vmatpush.msra.mxu0 0.0
  %1266 = vmatpush.msra.mxu0 0.0
  %1267 = vmatpush.msra.mxu0 0.0
  %1268 = vmatpush.msra.mxu0 %v1251
  %1269 = vmatpush.msra.mxu0 %v1250
  %1270 = vmatpush.msra.mxu0 %v1249
  %1271 = vmatpush.msra.mxu0 %v1248
  %1272 = vmatpush.msra.mxu0 %v1247
  %1273 = vmatpush.msra.mxu0 %v1246
  %1274 = vmatpush.msra.mxu0 %v1245
  %1275 = vmatpush.msra.mxu0 %v1244
  %1276 = vmatmul.f32.gmra.mxu0 %v1255
  %v1277 = vpop.f32.mrf.mxu0
  %v1278 = vadd.f32 %v1253, %v1277
  %1279 = vmatmul.f32.gmra.mxu0 %v1258
  %v1280 = vpop.f32.mrf.mxu0
  %v1281 = vadd.f32 %v1253, %v1280
  %1282 = vdwg.mxu0
  %v1283 = vadd.f32 %v1200, %v1278
  %v1284 = vadd.f32 %v1201, %v1281
  %v1285 = vld [vmem:[%s8 + $0xa] sm:$0x1]
  %v1286 = vld [vmem:[%s8 + $0xb] sm:$0x1]
  %v1287 = vsel %vm59, %v1283, 0.0
  %1288 = vadd.xlane.f32.xlu0 %v1287
  %v1289 = vpop.xlane.xlu0 %1288
  %v1290 = vsel %vm59, %v1284, 0.0
  %1291 = vadd.xlane.f32.xlu0 %v1290
  %v1292 = vpop.xlane.xlu0 %1291
  %v1293 = vmul.f32 %v1289, %v516
  %v1294 = vmul.f32 %v1292, %v516
  %v1295 = vsub.f32 %v1283, %v1293
  %v1296 = vsub.f32 %v1284, %v1294
  %v1297 = vmul.f32 %v1295, %v1295
  %v1298 = vmul.f32 %v1296, %v1296
  %v1299 = vsel %vm59, %v1297, 0.0
  %1300 = vadd.xlane.f32.xlu0 %v1299
  %v1301 = vpop.xlane.xlu0 %1300
  %v1302 = vsel %vm59, %v1298, 0.0
  %1303 = vadd.xlane.f32.xlu0 %v1302
  %v1304 = vpop.xlane.xlu0 %1303
  %v1305 = vmul.f32 %v1301, %v516
  %v1306 = vmul.f32 %v1304, %v516
  %v1307 = vadd.f32 %v1305, 1e-05
  %v1308 = vadd.f32 %v1306, 1e-05
  %v1309 = vrsqrt.pop %v1307
  %v1310 = vmul.f32 %v1309, %v1307
  %v1311 = vmul.f32 %v1310, %v1309
  %v1312 = vmul.f32 0.5, %v1311
  %v1313 = vsub.f32 1.5, %v1312
  %v1314 = vmul.f32 %v1309, %v1313
  %vm1315 = vweird.f32 %v1307
  %vm1316 = vweird.f32 %v1309
  %vm1317 = vmor %vm1315, %vm1316
  %v1318 = vsel %vm1317, %v1309, %v1314
  %v1319 = vrsqrt.pop %v1308
  %v1320 = vmul.f32 %v1319, %v1308
  %v1321 = vmul.f32 %v1320, %v1319
  %v1322 = vmul.f32 0.5, %v1321
  %v1323 = vsub.f32 1.5, %v1322
  %v1324 = vmul.f32 %v1319, %v1323
  %vm1325 = vweird.f32 %v1308
  %vm1326 = vweird.f32 %v1319
  %vm1327 = vmor %vm1325, %vm1326
  %v1328 = vsel %vm1327, %v1319, %v1324
  %v1329 = vmul.f32 %v1295, %v1318
  %v1330 = vmul.f32 %v1296, %v1328
  %v1331 = vperm.slane %v1285, 0
  %v1332 = vmul.f32 %v1329, %v1331
  %v1333 = vmul.f32 %v1330, %v1331
  %v1334 = vperm.slane %v1286, 0
  %v1335 = vadd.f32 %v1332, %v1334
  %v1336 = vadd.f32 %v1333, %v1334
  %v1337 = vld [vmem:[%s2] sm:$0xff]
  %v1339 = vsel %vm150, %v1337, 0
  %1341 = vmatpush.msra.mxu0 0.0
  %1342 = vmatpush.msra.mxu0 0.0
  %1343 = vmatpush.msra.mxu0 0.0
  %1344 = vmatpush.msra.mxu0 0.0
  %1345 = vmatpush.msra.mxu0 0.0
  %1346 = vmatpush.msra.mxu0 0.0
  %1347 = vmatpush.msra.mxu0 0.0
  %1348 = vmatpush.msra.mxu0 0.0
  %1349 = vmatpush.msra.mxu0 0.0
  %1350 = vmatpush.msra.mxu0 0.0
  %1351 = vmatpush.msra.mxu0 0.0
  %1352 = vmatpush.msra.mxu0 0.0
  %1353 = vmatpush.msra.mxu0 0.0
  %1354 = vmatpush.msra.mxu0 0.0
  %1355 = vmatpush.msra.mxu0 %v1336
  %1356 = vmatpush.msra.mxu0 %v1335
  %1357 = vmatmul.f32.gmra.mxu0 %v1339
  %v1358 = vpop.f32.mrf.mxu0
  %v1359 = vadd.f32 0.0, %v1358
  %1360 = vdwg.mxu0
  %v1361 = vld [vmem:[%s9] sm:$0x1]
  %v1362 = vld [vmem:[%s9 + $0x1] sm:$0x1]
  %v1363 = vsel %vm59, %v1359, 0.0
  %1364 = vadd.xlane.f32.xlu0 %v1363
  %v1365 = vpop.xlane.xlu0 %1364
  %v1366 = vmul.f32 %v1365, %v516
  %v1367 = vsub.f32 %v1359, %v1366
  %v1368 = vmul.f32 %v1367, %v1367
  %v1369 = vsel %vm59, %v1368, 0.0
  %1370 = vadd.xlane.f32.xlu0 %v1369
  %v1371 = vpop.xlane.xlu0 %1370
  %v1372 = vmul.f32 %v1371, %v516
  %v1373 = vadd.f32 %v1372, 1e-05
  %v1374 = vrsqrt.pop %v1373
  %v1375 = vmul.f32 %v1374, %v1373
  %v1376 = vmul.f32 %v1375, %v1374
  %v1377 = vmul.f32 0.5, %v1376
  %v1378 = vsub.f32 1.5, %v1377
  %v1379 = vmul.f32 %v1374, %v1378
  %vm1380 = vweird.f32 %v1373
  %vm1381 = vweird.f32 %v1374
  %vm1382 = vmor %vm1380, %vm1381
  %v1383 = vsel %vm1382, %v1374, %v1379
  %v1384 = vmul.f32 %v1367, %v1383
  %v1385 = vperm.slane %v1361, 0
  %v1386 = vmul.f32 %v1384, %v1385
  %v1387 = vperm.slane %v1362, 0
  %v1388 = vadd.f32 %v1386, %v1387
  %v1389 = vld [vmem:[%s10] sm:$0xff]
  %v1390 = vld [vmem:[%s10 + $0x8] sm:$0xff]
  %v1391 = vld [vmem:[%s10 + $0x10] sm:$0xff]
  %v1392 = vld [vmem:[%s10 + $0x18] sm:$0xff]
  %v1393 = vld [vmem:[%s11] sm:$0x1]
  %v1395 = vperm.slane %v1393, 0
  %v1398 = vsel %vm59, %v1388, 0
  %1400 = vmatpush.msra.mxu0 0.0
  %1401 = vmatpush.msra.mxu0 0.0
  %1402 = vmatpush.msra.mxu0 0.0
  %1403 = vmatpush.msra.mxu0 0.0
  %1404 = vmatpush.msra.mxu0 0.0
  %1405 = vmatpush.msra.mxu0 0.0
  %1406 = vmatpush.msra.mxu0 0.0
  %1407 = vmatpush.msra.mxu0 0.0
  %1408 = vmatpush.msra.mxu0 0.0
  %1409 = vmatpush.msra.mxu0 0.0
  %1410 = vmatpush.msra.mxu0 0.0
  %1411 = vmatpush.msra.mxu0 0.0
  %1412 = vmatpush.msra.mxu0 %v1392
  %1413 = vmatpush.msra.mxu0 %v1391
  %1414 = vmatpush.msra.mxu0 %v1390
  %1415 = vmatpush.msra.mxu0 %v1389
  %1416 = vmatmul.f32.gmra.mxu0 %v1398
  %v1417 = vpop.f32.mrf.mxu0
  %v1418 = vadd.f32 %v1395, %v1417
  %1419 = vdwg.mxu0
  %1420 = vst [vmem:[%s12] sm:$0xff] %v1418
  // Predicated region
  $region50: #{forward.1} parent=0 // pred_check
    _
  $region51: #{forward.1} parent=0 // pred_check_branch
    %1422 = sbr.rel (0) target = $region53
  $region52: #{forward.1} parent=0 // pred_region
    _
  $region53: #{forward.1} parent=0 // pred_fallthru
    _
  // Predicated region
  $region54: #{forward.1} parent=0 // pred_check
    _
  $region55: #{forward.1} parent=0 // pred_check_branch
    %1424 = sbr.rel (0) target = $region57
  $region56: #{forward.1} parent=0 // pred_region
    _
  $region57: #{forward.1} parent=0 // pred_fallthru
    _

</llo_original>
